<compile_context>
chip_gen: v7x
topology: tpu7x:2x2x1
jax: 0.10.0
libtpu: 0.0.40
codegen_flags: <defaults>
</compile_context>

<pallas_src>
import functools

import jax
import jax.numpy as jnp
from jax import lax
from jax.experimental import pallas as pl
from jax.experimental.pallas import tpu as pltpu

V_TH = 1.0
LANE = 128
SUBLANE = 8


def _round_up(x, m):
    return ((x + m - 1) // m) * m


# ----------------------------- Pallas kernel ------------------------------ #
def _fused_lif_kernel(x_ref, w1_ref, b1_ref, w2_ref, b2_ref, rate_ref,
                      *, T, inv_tau, mm_dtype):
    """Fused fc_1 + fc_2 (Linear + LIF over T timesteps) for one batch tile.

    x_ref    : [BT, Din]  flattened image (identical at every timestep), mm_dtype
    w1_ref   : [Din, Hp]  fc_1 weight (mm_dtype; Hp = hidden padded to 128 lanes)
    b1_ref   : [1, Hp]    fc_1 bias (f32)
    w2_ref   : [Hp, Op]   fc_2 weight (mm_dtype; Op = output padded to 128 lanes)
    b2_ref   : [1, Op]    fc_2 bias (f32)
    rate_ref : [BT, Op]   time-averaged fc_2 spikes (== x.mean(dim=1) in torch)
    """
    # fc_1 input current is identical for every t -> ONE matmul on the MXU.
    cur1 = jnp.dot(x_ref[...], w1_ref[...],
                   preferred_element_type=jnp.float32) + b1_ref[...]
    w2 = w2_ref[...]
    b2 = b2_ref[...]

    bt = rate_ref.shape[0]
    op = rate_ref.shape[1]
    hp = cur1.shape[1]

    def body(_, carry):
        mem1, mem2, acc = carry
        # --- block 1 LIF (pure VPU) -------------------------------------- #
        mem1 = mem1 + (cur1 - mem1) * inv_tau
        fire1 = mem1 >= V_TH
        s1 = jnp.where(fire1, 1.0, 0.0)          # select, no cast/mul chain
        mem1 = jnp.where(fire1, 0.0, mem1)       # hard reset
        # --- block 2: one small matmul per t; spikes never leave vregs ---- #
        cur2 = jnp.dot(s1.astype(mm_dtype), w2,
                       preferred_element_type=jnp.float32) + b2
        mem2 = mem2 + (cur2 - mem2) * inv_tau
        fire2 = mem2 >= V_TH
        acc = acc + jnp.where(fire2, 1.0, 0.0)
        mem2 = jnp.where(fire2, 0.0, mem2)
        return mem1, mem2, acc

    init = (jnp.zeros((bt, hp), jnp.float32),
            jnp.zeros((bt, op), jnp.float32),
            jnp.zeros((bt, op), jnp.float32))
    _, _, acc = lax.fori_loop(0, T, body, init, unroll=True)

    # Only the time-averaged spike rate is consumed downstream; write once,
    # lane-dense (Op is a multiple of 128).
    rate_ref[...] = acc * (1.0 / T)


# ------------------------- one-time parameter prep ------------------------- #
def prepare_params(params, *, use_bf16=False):
    """Pad weights to TPU-friendly shapes (and optionally cast to bf16) ONCE.

    Zero padding is exact: padded hidden units never spike and padded output
    columns are sliced away. Biases stay f32 (they add into f32 currents).
    """
    w1 = jnp.asarray(params["w1"], jnp.float32)
    b1 = jnp.asarray(params["b1"], jnp.float32)
    w2 = jnp.asarray(params["w2"], jnp.float32)
    b2 = jnp.asarray(params["b2"], jnp.float32)
    din, hidden = w1.shape
    out = w2.shape[1]
    hp = _round_up(hidden, LANE)
    op = _round_up(out, LANE)
    mm_dtype = jnp.bfloat16 if use_bf16 else jnp.float32

    w1p = jnp.zeros((din, hp), jnp.float32).at[:, :hidden].set(w1).astype(mm_dtype)
    b1p = jnp.zeros((1, hp), jnp.float32).at[0, :hidden].set(b1)
    w2p = jnp.zeros((hp, op), jnp.float32).at[:hidden, :out].set(w2).astype(mm_dtype)
    b2p = jnp.zeros((1, op), jnp.float32).at[0, :out].set(b2)
    return {"w1": w1p, "b1": b1p, "w2": w2p, "b2": b2p,
            "din": int(din), "hidden": int(hidden), "out": int(out),
            "hp": int(hp), "op": int(op), "mm_dtype": mm_dtype}


# ------------------------------ model wrapper ------------------------------ #
def sddtp_lifnet_forward(x, labels, prep, T, tau, *, max_bt=256):
    """Eval forward of SDDTP_LIFNet.

    x      : [B, C, H, W] (NCHW, like PyTorch)
    labels : [B, output_size]
    prep   : output of prepare_params()
    returns (x.mean(1) [B, output_size], mse_loss(x.mean(1), labels))
    """
    B = x.shape[0]
    din, out = prep["din"], prep["out"]
    hp, op = prep["hp"], prep["op"]
    mm_dtype = prep["mm_dtype"]

    # input.unsqueeze(1).repeat(1,T,1,1,1); flatten(2) -> [B,T,Din]; the repeat
    # is NOT materialized: the kernel reuses one fc_1 matmul for all T steps.
    x_flat = x.reshape(B, din).astype(mm_dtype)

    # Batch tile: sublane-aligned, capped, and split so the grid has >= 2
    # steps when possible (v7x dual-TC sharding via "parallel").
    bt = min(_round_up(B, SUBLANE), max_bt)
    b_pad = _round_up(B, bt)
    if b_pad // bt < 2 and b_pad >= 2 * SUBLANE:
        bt = max(SUBLANE, ((b_pad // 2) // SUBLANE) * SUBLANE)
        b_pad = _round_up(B, bt)

    if b_pad == B:
        x_pad = x_flat                      # no per-call copy when aligned
    else:
        # NOTE: padded rows see cur1 = b1 and may spike (dead compute only);
        # their outputs are sliced away below.
        x_pad = jnp.zeros((b_pad, din), mm_dtype).at[:B].set(x_flat)

    kernel = functools.partial(_fused_lif_kernel,
                               T=int(T), inv_tau=1.0 / float(tau),
                               mm_dtype=mm_dtype)

    # VMEM budget from the actual footprint (v5e default scoped VMEM = 16 MiB;
    # v7x physical = 64 MiB), clamped to a safe range.
    mm_bytes = jnp.dtype(mm_dtype).itemsize
    vmem_need = (2 * bt * din * mm_bytes                 # x tile, double-buffered
                 + 2 * bt * op * 4                       # rate tile, double-buffered
                 + (din * hp + hp * op) * mm_bytes       # weights (single-buffered)
                 + (hp + op) * 4                         # biases
                 + 4 * bt * max(hp, op) * 4)             # live f32 state headroom
    vmem_limit = int(min(max(2 * vmem_need, 32 << 20), 48 << 20))

    def _build(single_buffer_weights):
        wmode = ({"pipeline_mode": pl.Buffered(1)} if single_buffer_weights
                 else {})
        return pl.pallas_call(
            kernel,
            out_shape=jax.ShapeDtypeStruct((b_pad, op), jnp.float32),
            grid=(b_pad // bt,),
            in_specs=[
                pl.BlockSpec((bt, din), lambda i: (i, 0)),            # x tile
                pl.BlockSpec((din, hp), lambda i: (0, 0), **wmode),   # w1
                pl.BlockSpec((1, hp), lambda i: (0, 0), **wmode),     # b1
                pl.BlockSpec((hp, op), lambda i: (0, 0), **wmode),    # w2
                pl.BlockSpec((1, op), lambda i: (0, 0), **wmode),     # b2
            ],
            out_specs=pl.BlockSpec((bt, op), lambda i: (i, 0)),
            compiler_params=pltpu.CompilerParams(
                dimension_semantics=("parallel",),
                vmem_limit_bytes=vmem_limit),
        )

    try:
        # Constant-index weights -> single buffer (halves resident weight VMEM).
        rate_pad = _build(True)(x_pad, prep["w1"], prep["b1"],
                                prep["w2"], prep["b2"])
    except Exception:
        # Fallback for toolchains without Buffered(1) on the main pipeline.
        rate_pad = _build(False)(x_pad, prep["w1"], prep["b1"],
                                 prep["w2"], prep["b2"])

    rate = rate_pad[:B, :out]
    # criterion = F.mse_loss (mean reduction) -- cheap glue, done in JAX.
    loss = jnp.mean((rate - labels) ** 2)
    # TODO(synk): training branch (label-target projection y_t inside FCBlock,
    # per-block local losses, surrogate gradients) not implemented; eval only.
    return rate, loss


# --------------------------- pure-JAX reference ---------------------------- #
def _reference_forward(x, labels, params, T, tau):
    B = x.shape[0]
    din = x.shape[1] * x.shape[2] * x.shape[3]
    xf = x.reshape(B, din).astype(jnp.float32)

    def run_block(inp_t, w, b):  # inp_t: [T, B, Din]
        dout = w.shape[1]
        mem = jnp.zeros((B, dout), jnp.float32)
        spikes = []
        for t in range(T):
            cur = inp_t[t] @ w + b
            mem = mem + (cur - mem) / tau
            s = (mem >= V_TH).astype(jnp.float32)
            mem = mem * (1.0 - s)
            spikes.append(s)
        spk = jnp.stack(spikes, 0)
        return spk, spk.mean(0)

    x_rep = jnp.broadcast_to(xf[None], (T, B, din))
    spk1, _ = run_block(x_rep, params["w1"], params["b1"])
    _, rate2 = run_block(spk1, params["w2"], params["b2"])
    return rate2, jnp.mean((rate2 - labels) ** 2)


# ----------------------------------- main ---------------------------------- #
if __name__ == "__main__":
    # Small shapes consistent with the module: FMNIST-like single-channel image
    B, C, H, W = 2, 1, 16, 16
    T = 4
    input_size = C * H * W          # 256
    hidden_size = 32
    output_size = 10
    tau = 2.0

    key = jax.random.PRNGKey(0)
    k_x, k_lab, k_w1, k_b1, k_w2, k_b2 = jax.random.split(key, 6)

    x = jax.random.uniform(k_x, (B, C, H, W), jnp.float32)
    labels = jax.nn.one_hot(
        jax.random.randint(k_lab, (B,), 0, output_size), output_size
    ).astype(jnp.float32)

    # Deterministic Linear init (PyTorch default: U(-1/sqrt(fan_in), +1/sqrt(fan_in)))
    def linear_init(kw, kb, fan_in, fan_out):
        lim = 1.0 / jnp.sqrt(jnp.float32(fan_in))
        w = jax.random.uniform(kw, (fan_in, fan_out), jnp.float32, -lim, lim)
        b = jax.random.uniform(kb, (fan_out,), jnp.float32, -lim, lim)
        return w, b

    w1, b1 = linear_init(k_w1, k_b1, input_size, hidden_size)
    w2, b2 = linear_init(k_w2, k_b2, hidden_size, output_size)
    params = {"w1": w1, "b1": b1, "w2": w2, "b2": b2}

    # f32 matmul path: bit-matches the f32 reference (tau=2.0 -> exact 1/tau).
    prep = prepare_params(params, use_bf16=False)
    rate, loss = sddtp_lifnet_forward(x, labels, prep, T, tau)
    jax.block_until_ready((rate, loss))

    rate_ref, loss_ref = _reference_forward(x, labels, params, T, tau)
    assert jnp.allclose(rate, rate_ref, atol=1e-5), "spike-rate mismatch"
    assert jnp.allclose(loss, loss_ref, atol=1e-5), "loss mismatch"

    # bf16-operand fast path (v6e/v7x): individual spikes can flip near the
    # V_TH threshold vs f32, so only shape/finiteness are asserted here.
    prep_bf16 = prepare_params(params, use_bf16=True)
    rate_b, loss_b = sddtp_lifnet_forward(x, labels, prep_bf16, T, tau)
    jax.block_until_ready((rate_b, loss_b))
    assert rate_b.shape == rate.shape and bool(jnp.isfinite(loss_b))

    print("KERNEL_OK")
</pallas_src>

<mosaic_0001>
module attributes {stable_mosaic.version = 11 : i64} {
  func.func @_fused_lif_kernel(%arg0: i32, %arg1: memref<8x256xf32, #tpu.memory_space<vmem>>, %arg2: memref<256x128xf32, #tpu.memory_space<vmem>>, %arg3: memref<1x128xf32, #tpu.memory_space<vmem>>, %arg4: memref<128x128xf32, #tpu.memory_space<vmem>>, %arg5: memref<1x128xf32, #tpu.memory_space<vmem>>, %arg6: memref<8x128xf32, #tpu.memory_space<vmem>>) attributes {dimension_semantics = [#tpu.dimension_semantics<parallel>], iteration_bounds = array<i64: 1>, scalar_prefetch = 0 : i64, scratch_operands = 0 : i64, tpu.core_type = #tpu.core_type<tc>, window_params = [{transform_indices = @transform_0, window_bounds = array<i64: 8, 256>}, {pipeline_mode = #tpu.pipeline_mode<synchronous>, transform_indices = @transform_1, window_bounds = array<i64: 256, 128>}, {pipeline_mode = #tpu.pipeline_mode<synchronous>, transform_indices = @transform_2, window_bounds = array<i64: 1, 128>}, {pipeline_mode = #tpu.pipeline_mode<synchronous>, transform_indices = @transform_3, window_bounds = array<i64: 128, 128>}, {pipeline_mode = #tpu.pipeline_mode<synchronous>, transform_indices = @transform_4, window_bounds = array<i64: 1, 128>}, {transform_indices = @transform_5, window_bounds = array<i64: 8, 128>}]} {
    %c0 = arith.constant 0 : index
    %c0_0 = arith.constant 0 : index
    %0 = vector.load %arg1[%c0, %c0_0] : memref<8x256xf32, #tpu.memory_space<vmem>>, vector<8x256xf32>
    %c0_1 = arith.constant 0 : index
    %c0_2 = arith.constant 0 : index
    %1 = vector.load %arg2[%c0_1, %c0_2] : memref<256x128xf32, #tpu.memory_space<vmem>>, vector<256x128xf32>
    %cst = arith.constant dense<0.000000e+00> : vector<8x128xf32>
    %2 = tpu.matmul %0, %1, %cst {dimension_numbers = #tpu.dot_dimension_numbers<[1], [0], [0], [1], [0, 0, 1, 1], [], []>} : vector<8x256xf32>, vector<256x128xf32>, vector<8x128xf32> -> vector<8x128xf32>
    %c0_3 = arith.constant 0 : index
    %c0_4 = arith.constant 0 : index
    %3 = vector.load %arg3[%c0_3, %c0_4] : memref<1x128xf32, #tpu.memory_space<vmem>>, vector<1x128xf32>
    %4 = vector.broadcast %3 : vector<1x128xf32> to vector<8x128xf32>
    %5 = arith.addf %2, %4 : vector<8x128xf32>
    %c0_5 = arith.constant 0 : index
    %c0_6 = arith.constant 0 : index
    %6 = vector.load %arg4[%c0_5, %c0_6] : memref<128x128xf32, #tpu.memory_space<vmem>>, vector<128x128xf32>
    %c0_7 = arith.constant 0 : index
    %c0_8 = arith.constant 0 : index
    %7 = vector.load %arg5[%c0_7, %c0_8] : memref<1x128xf32, #tpu.memory_space<vmem>>, vector<1x128xf32>
    %cst_9 = arith.constant 0.000000e+00 : f32
    %8 = vector.broadcast %cst_9 : f32 to vector<8x128xf32>
    %cst_10 = arith.constant 0.000000e+00 : f32
    %9 = vector.broadcast %cst_10 : f32 to vector<8x128xf32>
    %cst_11 = arith.constant 0.000000e+00 : f32
    %10 = vector.broadcast %cst_11 : f32 to vector<8x128xf32>
    %c0_i32 = arith.constant 0 : i32
    %11 = arith.subf %5, %8 : vector<8x128xf32>
    %cst_12 = arith.constant 5.000000e-01 : f32
    %12 = vector.broadcast %cst_12 : f32 to vector<8x128xf32>
    %13 = arith.mulf %11, %12 : vector<8x128xf32>
    %14 = arith.addf %8, %13 : vector<8x128xf32>
    %cst_13 = arith.constant 1.000000e+00 : f32
    %15 = vector.broadcast %cst_13 : f32 to vector<8x128xf32>
    %16 = arith.cmpf oge, %14, %15 : vector<8x128xf32>
    %cst_14 = arith.constant 1.000000e+00 : f32
    %cst_15 = arith.constant 0.000000e+00 : f32
    %17 = vector.broadcast %cst_14 : f32 to vector<8x128xf32>
    %18 = vector.broadcast %cst_15 : f32 to vector<8x128xf32>
    %19 = arith.select %16, %17, %18 : vector<8x128xi1>, vector<8x128xf32>
    %cst_16 = arith.constant 0.000000e+00 : f32
    %20 = vector.broadcast %cst_16 : f32 to vector<8x128xf32>
    %21 = arith.select %16, %20, %14 : vector<8x128xi1>, vector<8x128xf32>
    %cst_17 = arith.constant dense<0.000000e+00> : vector<8x128xf32>
    %22 = tpu.matmul %19, %6, %cst_17 {dimension_numbers = #tpu.dot_dimension_numbers<[1], [0], [0], [1], [0, 0, 1, 1], [], []>} : vector<8x128xf32>, vector<128x128xf32>, vector<8x128xf32> -> vector<8x128xf32>
    %23 = vector.broadcast %7 : vector<1x128xf32> to vector<8x128xf32>
    %24 = arith.addf %22, %23 : vector<8x128xf32>
    %25 = arith.subf %24, %9 : vector<8x128xf32>
    %cst_18 = arith.constant 5.000000e-01 : f32
    %26 = vector.broadcast %cst_18 : f32 to vector<8x128xf32>
    %27 = arith.mulf %25, %26 : vector<8x128xf32>
    %28 = arith.addf %9, %27 : vector<8x128xf32>
    %cst_19 = arith.constant 1.000000e+00 : f32
    %29 = vector.broadcast %cst_19 : f32 to vector<8x128xf32>
    %30 = arith.cmpf oge, %28, %29 : vector<8x128xf32>
    %cst_20 = arith.constant 1.000000e+00 : f32
    %cst_21 = arith.constant 0.000000e+00 : f32
    %31 = vector.broadcast %cst_20 : f32 to vector<8x128xf32>
    %32 = vector.broadcast %cst_21 : f32 to vector<8x128xf32>
    %33 = arith.select %30, %31, %32 : vector<8x128xi1>, vector<8x128xf32>
    %34 = arith.addf %10, %33 : vector<8x128xf32>
    %cst_22 = arith.constant 0.000000e+00 : f32
    %35 = vector.broadcast %cst_22 : f32 to vector<8x128xf32>
    %36 = arith.select %30, %35, %28 : vector<8x128xi1>, vector<8x128xf32>
    %c1_i32 = arith.constant 1 : i32
    %37 = arith.subf %5, %21 : vector<8x128xf32>
    %cst_23 = arith.constant 5.000000e-01 : f32
    %38 = vector.broadcast %cst_23 : f32 to vector<8x128xf32>
    %39 = arith.mulf %37, %38 : vector<8x128xf32>
    %40 = arith.addf %21, %39 : vector<8x128xf32>
    %cst_24 = arith.constant 1.000000e+00 : f32
    %41 = vector.broadcast %cst_24 : f32 to vector<8x128xf32>
    %42 = arith.cmpf oge, %40, %41 : vector<8x128xf32>
    %cst_25 = arith.constant 1.000000e+00 : f32
    %cst_26 = arith.constant 0.000000e+00 : f32
    %43 = vector.broadcast %cst_25 : f32 to vector<8x128xf32>
    %44 = vector.broadcast %cst_26 : f32 to vector<8x128xf32>
    %45 = arith.select %42, %43, %44 : vector<8x128xi1>, vector<8x128xf32>
    %cst_27 = arith.constant 0.000000e+00 : f32
    %46 = vector.broadcast %cst_27 : f32 to vector<8x128xf32>
    %47 = arith.select %42, %46, %40 : vector<8x128xi1>, vector<8x128xf32>
    %cst_28 = arith.constant dense<0.000000e+00> : vector<8x128xf32>
    %48 = tpu.matmul %45, %6, %cst_28 {dimension_numbers = #tpu.dot_dimension_numbers<[1], [0], [0], [1], [0, 0, 1, 1], [], []>} : vector<8x128xf32>, vector<128x128xf32>, vector<8x128xf32> -> vector<8x128xf32>
    %49 = vector.broadcast %7 : vector<1x128xf32> to vector<8x128xf32>
    %50 = arith.addf %48, %49 : vector<8x128xf32>
    %51 = arith.subf %50, %36 : vector<8x128xf32>
    %cst_29 = arith.constant 5.000000e-01 : f32
    %52 = vector.broadcast %cst_29 : f32 to vector<8x128xf32>
    %53 = arith.mulf %51, %52 : vector<8x128xf32>
    %54 = arith.addf %36, %53 : vector<8x128xf32>
    %cst_30 = arith.constant 1.000000e+00 : f32
    %55 = vector.broadcast %cst_30 : f32 to vector<8x128xf32>
    %56 = arith.cmpf oge, %54, %55 : vector<8x128xf32>
    %cst_31 = arith.constant 1.000000e+00 : f32
    %cst_32 = arith.constant 0.000000e+00 : f32
    %57 = vector.broadcast %cst_31 : f32 to vector<8x128xf32>
    %58 = vector.broadcast %cst_32 : f32 to vector<8x128xf32>
    %59 = arith.select %56, %57, %58 : vector<8x128xi1>, vector<8x128xf32>
    %60 = arith.addf %34, %59 : vector<8x128xf32>
    %cst_33 = arith.constant 0.000000e+00 : f32
    %61 = vector.broadcast %cst_33 : f32 to vector<8x128xf32>
    %62 = arith.select %56, %61, %54 : vector<8x128xi1>, vector<8x128xf32>
    %c2_i32 = arith.constant 2 : i32
    %63 = arith.subf %5, %47 : vector<8x128xf32>
    %cst_34 = arith.constant 5.000000e-01 : f32
    %64 = vector.broadcast %cst_34 : f32 to vector<8x128xf32>
    %65 = arith.mulf %63, %64 : vector<8x128xf32>
    %66 = arith.addf %47, %65 : vector<8x128xf32>
    %cst_35 = arith.constant 1.000000e+00 : f32
    %67 = vector.broadcast %cst_35 : f32 to vector<8x128xf32>
    %68 = arith.cmpf oge, %66, %67 : vector<8x128xf32>
    %cst_36 = arith.constant 1.000000e+00 : f32
    %cst_37 = arith.constant 0.000000e+00 : f32
    %69 = vector.broadcast %cst_36 : f32 to vector<8x128xf32>
    %70 = vector.broadcast %cst_37 : f32 to vector<8x128xf32>
    %71 = arith.select %68, %69, %70 : vector<8x128xi1>, vector<8x128xf32>
    %cst_38 = arith.constant 0.000000e+00 : f32
    %72 = vector.broadcast %cst_38 : f32 to vector<8x128xf32>
    %73 = arith.select %68, %72, %66 : vector<8x128xi1>, vector<8x128xf32>
    %cst_39 = arith.constant dense<0.000000e+00> : vector<8x128xf32>
    %74 = tpu.matmul %71, %6, %cst_39 {dimension_numbers = #tpu.dot_dimension_numbers<[1], [0], [0], [1], [0, 0, 1, 1], [], []>} : vector<8x128xf32>, vector<128x128xf32>, vector<8x128xf32> -> vector<8x128xf32>
    %75 = vector.broadcast %7 : vector<1x128xf32> to vector<8x128xf32>
    %76 = arith.addf %74, %75 : vector<8x128xf32>
    %77 = arith.subf %76, %62 : vector<8x128xf32>
    %cst_40 = arith.constant 5.000000e-01 : f32
    %78 = vector.broadcast %cst_40 : f32 to vector<8x128xf32>
    %79 = arith.mulf %77, %78 : vector<8x128xf32>
    %80 = arith.addf %62, %79 : vector<8x128xf32>
    %cst_41 = arith.constant 1.000000e+00 : f32
    %81 = vector.broadcast %cst_41 : f32 to vector<8x128xf32>
    %82 = arith.cmpf oge, %80, %81 : vector<8x128xf32>
    %cst_42 = arith.constant 1.000000e+00 : f32
    %cst_43 = arith.constant 0.000000e+00 : f32
    %83 = vector.broadcast %cst_42 : f32 to vector<8x128xf32>
    %84 = vector.broadcast %cst_43 : f32 to vector<8x128xf32>
    %85 = arith.select %82, %83, %84 : vector<8x128xi1>, vector<8x128xf32>
    %86 = arith.addf %60, %85 : vector<8x128xf32>
    %cst_44 = arith.constant 0.000000e+00 : f32
    %87 = vector.broadcast %cst_44 : f32 to vector<8x128xf32>
    %88 = arith.select %82, %87, %80 : vector<8x128xi1>, vector<8x128xf32>
    %c3_i32 = arith.constant 3 : i32
    %89 = arith.subf %5, %73 : vector<8x128xf32>
    %cst_45 = arith.constant 5.000000e-01 : f32
    %90 = vector.broadcast %cst_45 : f32 to vector<8x128xf32>
    %91 = arith.mulf %89, %90 : vector<8x128xf32>
    %92 = arith.addf %73, %91 : vector<8x128xf32>
    %cst_46 = arith.constant 1.000000e+00 : f32
    %93 = vector.broadcast %cst_46 : f32 to vector<8x128xf32>
    %94 = arith.cmpf oge, %92, %93 : vector<8x128xf32>
    %cst_47 = arith.constant 1.000000e+00 : f32
    %cst_48 = arith.constant 0.000000e+00 : f32
    %95 = vector.broadcast %cst_47 : f32 to vector<8x128xf32>
    %96 = vector.broadcast %cst_48 : f32 to vector<8x128xf32>
    %97 = arith.select %94, %95, %96 : vector<8x128xi1>, vector<8x128xf32>
    %cst_49 = arith.constant 0.000000e+00 : f32
    %98 = vector.broadcast %cst_49 : f32 to vector<8x128xf32>
    %99 = arith.select %94, %98, %92 : vector<8x128xi1>, vector<8x128xf32>
    %cst_50 = arith.constant dense<0.000000e+00> : vector<8x128xf32>
    %100 = tpu.matmul %97, %6, %cst_50 {dimension_numbers = #tpu.dot_dimension_numbers<[1], [0], [0], [1], [0, 0, 1, 1], [], []>} : vector<8x128xf32>, vector<128x128xf32>, vector<8x128xf32> -> vector<8x128xf32>
    %101 = vector.broadcast %7 : vector<1x128xf32> to vector<8x128xf32>
    %102 = arith.addf %100, %101 : vector<8x128xf32>
    %103 = arith.subf %102, %88 : vector<8x128xf32>
    %cst_51 = arith.constant 5.000000e-01 : f32
    %104 = vector.broadcast %cst_51 : f32 to vector<8x128xf32>
    %105 = arith.mulf %103, %104 : vector<8x128xf32>
    %106 = arith.addf %88, %105 : vector<8x128xf32>
    %cst_52 = arith.constant 1.000000e+00 : f32
    %107 = vector.broadcast %cst_52 : f32 to vector<8x128xf32>
    %108 = arith.cmpf oge, %106, %107 : vector<8x128xf32>
    %cst_53 = arith.constant 1.000000e+00 : f32
    %cst_54 = arith.constant 0.000000e+00 : f32
    %109 = vector.broadcast %cst_53 : f32 to vector<8x128xf32>
    %110 = vector.broadcast %cst_54 : f32 to vector<8x128xf32>
    %111 = arith.select %108, %109, %110 : vector<8x128xi1>, vector<8x128xf32>
    %112 = arith.addf %86, %111 : vector<8x128xf32>
    %cst_55 = arith.constant 0.000000e+00 : f32
    %113 = vector.broadcast %cst_55 : f32 to vector<8x128xf32>
    %114 = arith.select %108, %113, %106 : vector<8x128xi1>, vector<8x128xf32>
    %cst_56 = arith.constant 2.500000e-01 : f32
    %115 = vector.broadcast %cst_56 : f32 to vector<8x128xf32>
    %116 = arith.mulf %112, %115 : vector<8x128xf32>
    %c0_57 = arith.constant 0 : index
    %c0_58 = arith.constant 0 : index
    %117 = vector.load %arg6[%c0_57, %c0_58] : memref<8x128xf32, #tpu.memory_space<vmem>>, vector<8x128xf32>
    tpu.vector_store %arg6[%c0_57, %c0_58], %116 {strides = array<i32>} : memref<8x128xf32, #tpu.memory_space<vmem>>, vector<8x128xf32>,
    return
  }
  func.func @transform_0(%arg0: i32) -> (i32, i32) {
    %c0_i32 = arith.constant 0 : i32
    %c0_i32_0 = arith.constant 0 : i32
    return %arg0, %c0_i32 : i32, i32
  }
  func.func @transform_1(%arg0: i32) -> (i32, i32) {
    %c0_i32 = arith.constant 0 : i32
    %c0_i32_0 = arith.constant 0 : i32
    %c0_i32_1 = arith.constant 0 : i32
    return %c0_i32, %c0_i32_0 : i32, i32
  }
  func.func @transform_2(%arg0: i32) -> (i32, i32) {
    %c0_i32 = arith.constant 0 : i32
    %c0_i32_0 = arith.constant 0 : i32
    %c0_i32_1 = arith.constant 0 : i32
    return %c0_i32, %c0_i32_0 : i32, i32
  }
  func.func @transform_3(%arg0: i32) -> (i32, i32) {
    %c0_i32 = arith.constant 0 : i32
    %c0_i32_0 = arith.constant 0 : i32
    %c0_i32_1 = arith.constant 0 : i32
    return %c0_i32, %c0_i32_0 : i32, i32
  }
  func.func @transform_4(%arg0: i32) -> (i32, i32) {
    %c0_i32 = arith.constant 0 : i32
    %c0_i32_0 = arith.constant 0 : i32
    %c0_i32_1 = arith.constant 0 : i32
    return %c0_i32, %c0_i32_0 : i32, i32
  }
  func.func @transform_5(%arg0: i32) -> (i32, i32) {
    %c0_i32 = arith.constant 0 : i32
    %c0_i32_0 = arith.constant 0 : i32
    return %arg0, %c0_i32 : i32, i32
  }
}

module attributes {stable_mosaic.version = 11 : i64} {
  func.func @_fused_lif_kernel(%arg0: i32, %arg1: memref<8x256xf32, #tpu.memory_space<vmem>>, %arg2: memref<256x128xf32, #tpu.memory_space<vmem>>, %arg3: memref<1x128xf32, #tpu.memory_space<vmem>>, %arg4: memref<128x128xf32, #tpu.memory_space<vmem>>, %arg5: memref<1x128xf32, #tpu.memory_space<vmem>>, %arg6: memref<8x128xf32, #tpu.memory_space<vmem>>) attributes {dimension_semantics = [#tpu.dimension_semantics<parallel>], iteration_bounds = array<i64: 1>, scalar_prefetch = 0 : i64, scratch_operands = 0 : i64, tpu.core_type = #tpu.core_type<tc>, window_params = [{transform_indices = @transform_0, window_bounds = array<i64: 8, 256>}, {pipeline_mode = #tpu.pipeline_mode<synchronous>, transform_indices = @transform_1, window_bounds = array<i64: 256, 128>}, {pipeline_mode = #tpu.pipeline_mode<synchronous>, transform_indices = @transform_2, window_bounds = array<i64: 1, 128>}, {pipeline_mode = #tpu.pipeline_mode<synchronous>, transform_indices = @transform_3, window_bounds = array<i64: 128, 128>}, {pipeline_mode = #tpu.pipeline_mode<synchronous>, transform_indices = @transform_4, window_bounds = array<i64: 1, 128>}, {transform_indices = @transform_5, window_bounds = array<i64: 8, 128>}]} {
    %c0 = arith.constant 0 : index
    %c0_0 = arith.constant 0 : index
    %0 = vector.load %arg1[%c0, %c0_0] : memref<8x256xf32, #tpu.memory_space<vmem>>, vector<8x256xf32>
    %c0_1 = arith.constant 0 : index
    %c0_2 = arith.constant 0 : index
    %1 = vector.load %arg2[%c0_1, %c0_2] : memref<256x128xf32, #tpu.memory_space<vmem>>, vector<256x128xf32>
    %cst = arith.constant dense<0.000000e+00> : vector<8x128xf32>
    %2 = tpu.matmul %0, %1, %cst {dimension_numbers = #tpu.dot_dimension_numbers<[1], [0], [0], [1], [0, 0, 1, 1], [], []>} : vector<8x256xf32>, vector<256x128xf32>, vector<8x128xf32> -> vector<8x128xf32>
    %c0_3 = arith.constant 0 : index
    %c0_4 = arith.constant 0 : index
    %3 = vector.load %arg3[%c0_3, %c0_4] : memref<1x128xf32, #tpu.memory_space<vmem>>, vector<1x128xf32>
    %4 = vector.broadcast %3 : vector<1x128xf32> to vector<8x128xf32>
    %5 = arith.addf %2, %4 : vector<8x128xf32>
    %c0_5 = arith.constant 0 : index
    %c0_6 = arith.constant 0 : index
    %6 = vector.load %arg4[%c0_5, %c0_6] : memref<128x128xf32, #tpu.memory_space<vmem>>, vector<128x128xf32>
    %c0_7 = arith.constant 0 : index
    %c0_8 = arith.constant 0 : index
    %7 = vector.load %arg5[%c0_7, %c0_8] : memref<1x128xf32, #tpu.memory_space<vmem>>, vector<1x128xf32>
    %cst_9 = arith.constant 0.000000e+00 : f32
    %8 = vector.broadcast %cst_9 : f32 to vector<8x128xf32>
    %cst_10 = arith.constant 0.000000e+00 : f32
    %9 = vector.broadcast %cst_10 : f32 to vector<8x128xf32>
    %cst_11 = arith.constant 0.000000e+00 : f32
    %10 = vector.broadcast %cst_11 : f32 to vector<8x128xf32>
    %c0_i32 = arith.constant 0 : i32
    %11 = arith.subf %5, %8 : vector<8x128xf32>
    %cst_12 = arith.constant 5.000000e-01 : f32
    %12 = vector.broadcast %cst_12 : f32 to vector<8x128xf32>
    %13 = arith.mulf %11, %12 : vector<8x128xf32>
    %14 = arith.addf %8, %13 : vector<8x128xf32>
    %cst_13 = arith.constant 1.000000e+00 : f32
    %15 = vector.broadcast %cst_13 : f32 to vector<8x128xf32>
    %16 = arith.cmpf oge, %14, %15 : vector<8x128xf32>
    %cst_14 = arith.constant 1.000000e+00 : f32
    %cst_15 = arith.constant 0.000000e+00 : f32
    %17 = vector.broadcast %cst_14 : f32 to vector<8x128xf32>
    %18 = vector.broadcast %cst_15 : f32 to vector<8x128xf32>
    %19 = arith.select %16, %17, %18 : vector<8x128xi1>, vector<8x128xf32>
    %cst_16 = arith.constant 0.000000e+00 : f32
    %20 = vector.broadcast %cst_16 : f32 to vector<8x128xf32>
    %21 = arith.select %16, %20, %14 : vector<8x128xi1>, vector<8x128xf32>
    %cst_17 = arith.constant dense<0.000000e+00> : vector<8x128xf32>
    %22 = tpu.matmul %19, %6, %cst_17 {dimension_numbers = #tpu.dot_dimension_numbers<[1], [0], [0], [1], [0, 0, 1, 1], [], []>} : vector<8x128xf32>, vector<128x128xf32>, vector<8x128xf32> -> vector<8x128xf32>
    %23 = vector.broadcast %7 : vector<1x128xf32> to vector<8x128xf32>
    %24 = arith.addf %22, %23 : vector<8x128xf32>
    %25 = arith.subf %24, %9 : vector<8x128xf32>
    %cst_18 = arith.constant 5.000000e-01 : f32
    %26 = vector.broadcast %cst_18 : f32 to vector<8x128xf32>
    %27 = arith.mulf %25, %26 : vector<8x128xf32>
    %28 = arith.addf %9, %27 : vector<8x128xf32>
    %cst_19 = arith.constant 1.000000e+00 : f32
    %29 = vector.broadcast %cst_19 : f32 to vector<8x128xf32>
    %30 = arith.cmpf oge, %28, %29 : vector<8x128xf32>
    %cst_20 = arith.constant 1.000000e+00 : f32
    %cst_21 = arith.constant 0.000000e+00 : f32
    %31 = vector.broadcast %cst_20 : f32 to vector<8x128xf32>
    %32 = vector.broadcast %cst_21 : f32 to vector<8x128xf32>
    %33 = arith.select %30, %31, %32 : vector<8x128xi1>, vector<8x128xf32>
    %34 = arith.addf %10, %33 : vector<8x128xf32>
    %cst_22 = arith.constant 0.000000e+00 : f32
    %35 = vector.broadcast %cst_22 : f32 to vector<8x128xf32>
    %36 = arith.select %30, %35, %28 : vector<8x128xi1>, vector<8x128xf32>
    %c1_i32 = arith.constant 1 : i32
    %37 = arith.subf %5, %21 : vector<8x128xf32>
    %cst_23 = arith.constant 5.000000e-01 : f32
    %38 = vector.broadcast %cst_23 : f32 to vector<8x128xf32>
    %39 = arith.mulf %37, %38 : vector<8x128xf32>
    %40 = arith.addf %21, %39 : vector<8x128xf32>
    %cst_24 = arith.constant 1.000000e+00 : f32
    %41 = vector.broadcast %cst_24 : f32 to vector<8x128xf32>
    %42 = arith.cmpf oge, %40, %41 : vector<8x128xf32>
    %cst_25 = arith.constant 1.000000e+00 : f32
    %cst_26 = arith.constant 0.000000e+00 : f32
    %43 = vector.broadcast %cst_25 : f32 to vector<8x128xf32>
    %44 = vector.broadcast %cst_26 : f32 to vector<8x128xf32>
    %45 = arith.select %42, %43, %44 : vector<8x128xi1>, vector<8x128xf32>
    %cst_27 = arith.constant 0.000000e+00 : f32
    %46 = vector.broadcast %cst_27 : f32 to vector<8x128xf32>
    %47 = arith.select %42, %46, %40 : vector<8x128xi1>, vector<8x128xf32>
    %cst_28 = arith.constant dense<0.000000e+00> : vector<8x128xf32>
    %48 = tpu.matmul %45, %6, %cst_28 {dimension_numbers = #tpu.dot_dimension_numbers<[1], [0], [0], [1], [0, 0, 1, 1], [], []>} : vector<8x128xf32>, vector<128x128xf32>, vector<8x128xf32> -> vector<8x128xf32>
    %49 = vector.broadcast %7 : vector<1x128xf32> to vector<8x128xf32>
    %50 = arith.addf %48, %49 : vector<8x128xf32>
    %51 = arith.subf %50, %36 : vector<8x128xf32>
    %cst_29 = arith.constant 5.000000e-01 : f32
    %52 = vector.broadcast %cst_29 : f32 to vector<8x128xf32>
    %53 = arith.mulf %51, %52 : vector<8x128xf32>
    %54 = arith.addf %36, %53 : vector<8x128xf32>
    %cst_30 = arith.constant 1.000000e+00 : f32
    %55 = vector.broadcast %cst_30 : f32 to vector<8x128xf32>
    %56 = arith.cmpf oge, %54, %55 : vector<8x128xf32>
    %cst_31 = arith.constant 1.000000e+00 : f32
    %cst_32 = arith.constant 0.000000e+00 : f32
    %57 = vector.broadcast %cst_31 : f32 to vector<8x128xf32>
    %58 = vector.broadcast %cst_32 : f32 to vector<8x128xf32>
    %59 = arith.select %56, %57, %58 : vector<8x128xi1>, vector<8x128xf32>
    %60 = arith.addf %34, %59 : vector<8x128xf32>
    %cst_33 = arith.constant 0.000000e+00 : f32
    %61 = vector.broadcast %cst_33 : f32 to vector<8x128xf32>
    %62 = arith.select %56, %61, %54 : vector<8x128xi1>, vector<8x128xf32>
    %c2_i32 = arith.constant 2 : i32
    %63 = arith.subf %5, %47 : vector<8x128xf32>
    %cst_34 = arith.constant 5.000000e-01 : f32
    %64 = vector.broadcast %cst_34 : f32 to vector<8x128xf32>
    %65 = arith.mulf %63, %64 : vector<8x128xf32>
    %66 = arith.addf %47, %65 : vector<8x128xf32>
    %cst_35 = arith.constant 1.000000e+00 : f32
    %67 = vector.broadcast %cst_35 : f32 to vector<8x128xf32>
    %68 = arith.cmpf oge, %66, %67 : vector<8x128xf32>
    %cst_36 = arith.constant 1.000000e+00 : f32
    %cst_37 = arith.constant 0.000000e+00 : f32
    %69 = vector.broadcast %cst_36 : f32 to vector<8x128xf32>
    %70 = vector.broadcast %cst_37 : f32 to vector<8x128xf32>
    %71 = arith.select %68, %69, %70 : vector<8x128xi1>, vector<8x128xf32>
    %cst_38 = arith.constant 0.000000e+00 : f32
    %72 = vector.broadcast %cst_38 : f32 to vector<8x128xf32>
    %73 = arith.select %68, %72, %66 : vector<8x128xi1>, vector<8x128xf32>
    %cst_39 = arith.constant dense<0.000000e+00> : vector<8x128xf32>
    %74 = tpu.matmul %71, %6, %cst_39 {dimension_numbers = #tpu.dot_dimension_numbers<[1], [0], [0], [1], [0, 0, 1, 1], [], []>} : vector<8x128xf32>, vector<128x128xf32>, vector<8x128xf32> -> vector<8x128xf32>
    %75 = vector.broadcast %7 : vector<1x128xf32> to vector<8x128xf32>
    %76 = arith.addf %74, %75 : vector<8x128xf32>
    %77 = arith.subf %76, %62 : vector<8x128xf32>
    %cst_40 = arith.constant 5.000000e-01 : f32
    %78 = vector.broadcast %cst_40 : f32 to vector<8x128xf32>
    %79 = arith.mulf %77, %78 : vector<8x128xf32>
    %80 = arith.addf %62, %79 : vector<8x128xf32>
    %cst_41 = arith.constant 1.000000e+00 : f32
    %81 = vector.broadcast %cst_41 : f32 to vector<8x128xf32>
    %82 = arith.cmpf oge, %80, %81 : vector<8x128xf32>
    %cst_42 = arith.constant 1.000000e+00 : f32
    %cst_43 = arith.constant 0.000000e+00 : f32
    %83 = vector.broadcast %cst_42 : f32 to vector<8x128xf32>
    %84 = vector.broadcast %cst_43 : f32 to vector<8x128xf32>
    %85 = arith.select %82, %83, %84 : vector<8x128xi1>, vector<8x128xf32>
    %86 = arith.addf %60, %85 : vector<8x128xf32>
    %cst_44 = arith.constant 0.000000e+00 : f32
    %87 = vector.broadcast %cst_44 : f32 to vector<8x128xf32>
    %88 = arith.select %82, %87, %80 : vector<8x128xi1>, vector<8x128xf32>
    %c3_i32 = arith.constant 3 : i32
    %89 = arith.subf %5, %73 : vector<8x128xf32>
    %cst_45 = arith.constant 5.000000e-01 : f32
    %90 = vector.broadcast %cst_45 : f32 to vector<8x128xf32>
    %91 = arith.mulf %89, %90 : vector<8x128xf32>
    %92 = arith.addf %73, %91 : vector<8x128xf32>
    %cst_46 = arith.constant 1.000000e+00 : f32
    %93 = vector.broadcast %cst_46 : f32 to vector<8x128xf32>
    %94 = arith.cmpf oge, %92, %93 : vector<8x128xf32>
    %cst_47 = arith.constant 1.000000e+00 : f32
    %cst_48 = arith.constant 0.000000e+00 : f32
    %95 = vector.broadcast %cst_47 : f32 to vector<8x128xf32>
    %96 = vector.broadcast %cst_48 : f32 to vector<8x128xf32>
    %97 = arith.select %94, %95, %96 : vector<8x128xi1>, vector<8x128xf32>
    %cst_49 = arith.constant 0.000000e+00 : f32
    %98 = vector.broadcast %cst_49 : f32 to vector<8x128xf32>
    %99 = arith.select %94, %98, %92 : vector<8x128xi1>, vector<8x128xf32>
    %cst_50 = arith.constant dense<0.000000e+00> : vector<8x128xf32>
    %100 = tpu.matmul %97, %6, %cst_50 {dimension_numbers = #tpu.dot_dimension_numbers<[1], [0], [0], [1], [0, 0, 1, 1], [], []>} : vector<8x128xf32>, vector<128x128xf32>, vector<8x128xf32> -> vector<8x128xf32>
    %101 = vector.broadcast %7 : vector<1x128xf32> to vector<8x128xf32>
    %102 = arith.addf %100, %101 : vector<8x128xf32>
    %103 = arith.subf %102, %88 : vector<8x128xf32>
    %cst_51 = arith.constant 5.000000e-01 : f32
    %104 = vector.broadcast %cst_51 : f32 to vector<8x128xf32>
    %105 = arith.mulf %103, %104 : vector<8x128xf32>
    %106 = arith.addf %88, %105 : vector<8x128xf32>
    %cst_52 = arith.constant 1.000000e+00 : f32
    %107 = vector.broadcast %cst_52 : f32 to vector<8x128xf32>
    %108 = arith.cmpf oge, %106, %107 : vector<8x128xf32>
    %cst_53 = arith.constant 1.000000e+00 : f32
    %cst_54 = arith.constant 0.000000e+00 : f32
    %109 = vector.broadcast %cst_53 : f32 to vector<8x128xf32>
    %110 = vector.broadcast %cst_54 : f32 to vector<8x128xf32>
    %111 = arith.select %108, %109, %110 : vector<8x128xi1>, vector<8x128xf32>
    %112 = arith.addf %86, %111 : vector<8x128xf32>
    %cst_55 = arith.constant 0.000000e+00 : f32
    %113 = vector.broadcast %cst_55 : f32 to vector<8x128xf32>
    %114 = arith.select %108, %113, %106 : vector<8x128xi1>, vector<8x128xf32>
    %cst_56 = arith.constant 2.500000e-01 : f32
    %115 = vector.broadcast %cst_56 : f32 to vector<8x128xf32>
    %116 = arith.mulf %112, %115 : vector<8x128xf32>
    %c0_57 = arith.constant 0 : index
    %c0_58 = arith.constant 0 : index
    %117 = vector.load %arg6[%c0_57, %c0_58] : memref<8x128xf32, #tpu.memory_space<vmem>>, vector<8x128xf32>
    tpu.vector_store %arg6[%c0_57, %c0_58], %116 {strides = array<i32>} : memref<8x128xf32, #tpu.memory_space<vmem>>, vector<8x128xf32>,
    return
  }
  func.func @transform_0(%arg0: i32) -> (i32, i32) {
    %c0_i32 = arith.constant 0 : i32
    %c0_i32_0 = arith.constant 0 : i32
    return %arg0, %c0_i32 : i32, i32
  }
  func.func @transform_1(%arg0: i32) -> (i32, i32) {
    %c0_i32 = arith.constant 0 : i32
    %c0_i32_0 = arith.constant 0 : i32
    %c0_i32_1 = arith.constant 0 : i32
    return %c0_i32, %c0_i32_0 : i32, i32
  }
  func.func @transform_2(%arg0: i32) -> (i32, i32) {
    %c0_i32 = arith.constant 0 : i32
    %c0_i32_0 = arith.constant 0 : i32
    %c0_i32_1 = arith.constant 0 : i32
    return %c0_i32, %c0_i32_0 : i32, i32
  }
  func.func @transform_3(%arg0: i32) -> (i32, i32) {
    %c0_i32 = arith.constant 0 : i32
    %c0_i32_0 = arith.constant 0 : i32
    %c0_i32_1 = arith.constant 0 : i32
    return %c0_i32, %c0_i32_0 : i32, i32
  }
  func.func @transform_4(%arg0: i32) -> (i32, i32) {
    %c0_i32 = arith.constant 0 : i32
    %c0_i32_0 = arith.constant 0 : i32
    %c0_i32_1 = arith.constant 0 : i32
    return %c0_i32, %c0_i32_0 : i32, i32
  }
  func.func @transform_5(%arg0: i32) -> (i32, i32) {
    %c0_i32 = arith.constant 0 : i32
    %c0_i32_0 = arith.constant 0 : i32
    return %arg0, %c0_i32 : i32, i32
  }
}

</mosaic_0001>

<llo_original>
// kernel: tpu_custom_call.1
$region0: #{tpu_custom_call.1}
  #allocation0 [shape = 'u32[]', space=smem, size = 0x4, offset = 0x4, fixed_abs, tag = 'smem constant byte address 0x4 - core index']
  #allocation1 [shape = 'u32[144,128]{1,0:T(1,128)}', space=vmem, size = 0x12000, scoped, tag = 'internal scratch']
  %s0 = inlined_call_operand.hbm [shape: f32[8,256], index: 0, kind: input, shape index: {}]
  %s1 = inlined_call_operand.hbm [shape: f32[256,128], index: 1, kind: input, shape index: {}]
  %s2 = inlined_call_operand.vmem [shape: f32[1,128], index: 2, kind: input, shape index: {}]
  %s3 = inlined_call_operand.hbm [shape: f32[128,128], index: 3, kind: input, shape index: {}]
  %s4 = inlined_call_operand.vmem [shape: f32[1,128], index: 4, kind: input, shape index: {}]
  %s5 = inlined_call_operand.hbm [shape: f32[8,128], index: 5, kind: output, shape index: {}]
  %s6 = sld [smem:[#allocation0]]
  $region42: #{tpu_custom_call.1} parent=0
    _
  %s8 = ssub.s32 1, %s6
  %s9 = scalar_select 0, %s8, %s6
  $region1: #{tpu_custom_call.1} parent=0
    #allocation2 [shape = 'u8[8192]{0}', space=vmem, size = 0x2000, scoped, tag = 'input window, operand 0, single buffered']
    #allocation3 [shape = 's32[1]{0}', space=sflag, size = 0x4, scoped, tag = 'scoped memory for tpu_custom_call.1']
    #allocation4 [shape = 's32[1]{0}', space=sflag, size = 0x4, scoped, tag = 'scoped memory for tpu_custom_call.1']
    #allocation5 [shape = 'u8[131072]{0}', space=vmem, size = 0x20000, scoped, tag = 'input window, operand 1, single buffered']
    #allocation6 [shape = 's32[1]{0}', space=sflag, size = 0x4, scoped, tag = 'scoped memory for tpu_custom_call.1']
    #allocation7 [shape = 'u8[65536]{0}', space=vmem, size = 0x10000, scoped, tag = 'input window, operand 3, single buffered']
    #allocation8 [shape = 'u8[4096]{0}', space=vmem, size = 0x1000, scoped, tag = 'output window, operand 0, single buffered']
    %10 = vsyncpa [#allocation3], 0
    %11 = vsyncpa [#allocation6], 0
    %12 = vsyncpa [#allocation4], 0
    // Predicated region
    $region2: #{tpu_custom_call.1} parent=1 // pred_check
      _
    $region3: #{tpu_custom_call.1} parent=1 // pred_check_branch
      %14 = sbr.rel (0) target = $region5
    $region4: #{tpu_custom_call.1} parent=1 // pred_region
      %s16 = ssub.s32 256, 256
      %17 = vsyncadd [#allocation3], %s16
      %s19 = sshll.u32 [#allocation2], 4
      %s20 = int_to_ptr.vmem [resolvable:$true] %s19
      %22 = dma.hbm_to_vmem [thread:$0]  %s0, 256, %s20, [#allocation3]
    $region5: #{tpu_custom_call.1} parent=1 // pred_fallthru
      _
    // Predicated region
    $region6: #{tpu_custom_call.1} parent=1 // pred_check
      _
    $region7: #{tpu_custom_call.1} parent=1 // pred_check_branch
      %24 = sbr.rel (0) target = $region9
    $region8: #{tpu_custom_call.1} parent=1 // pred_region
      %s26 = ssub.s32 4096, 4096
      %27 = vsyncadd [#allocation6], %s26
      %s28 = sshll.u32 [#allocation5], 4
      %s29 = int_to_ptr.vmem [resolvable:$true] %s28
      %34 = dma.hbm_to_vmem [thread:$0]  %s1, 4096, %s29, [#allocation6], 128, 128, 8
    $region9: #{tpu_custom_call.1} parent=1 // pred_fallthru
      _
    // Predicated region
    $region10: #{tpu_custom_call.1} parent=1 // pred_check
      _
    $region11: #{tpu_custom_call.1} parent=1 // pred_check_branch
      %36 = sbr.rel (0) target = $region13
    $region12: #{tpu_custom_call.1} parent=1 // pred_region
      _
    $region13: #{tpu_custom_call.1} parent=1 // pred_fallthru
      _
    // Predicated region
    $region14: #{tpu_custom_call.1} parent=1 // pred_check
      _
    $region15: #{tpu_custom_call.1} parent=1 // pred_check_branch
      %38 = sbr.rel (0) target = $region17
    $region16: #{tpu_custom_call.1} parent=1 // pred_region
      %s40 = ssub.s32 2048, 2048
      %41 = vsyncadd [#allocation6], %s40
      %s42 = sshll.u32 [#allocation7], 4
      %s43 = int_to_ptr.vmem [resolvable:$true] %s42
      %48 = dma.hbm_to_vmem [thread:$0]  %s3, 2048, %s43, [#allocation6], 128, 128, 8
    $region17: #{tpu_custom_call.1} parent=1 // pred_fallthru
      _
    // Predicated region
    $region18: #{tpu_custom_call.1} parent=1 // pred_check
      _
    $region19: #{tpu_custom_call.1} parent=1 // pred_check_branch
      %50 = sbr.rel (0) target = $region21
    $region20: #{tpu_custom_call.1} parent=1 // pred_region
      _
    $region21: #{tpu_custom_call.1} parent=1 // pred_fallthru
      _
    // Predicated region
    $region22: #{tpu_custom_call.1} parent=1 // pred_check
      _
    $region23: #{tpu_custom_call.1} parent=1 // pred_check_branch
      %52 = sbr.rel (0) target = $region25
    $region24: #{tpu_custom_call.1} parent=1 // pred_region
      %53 = dma.done [#allocation3], 256
    $region25: #{tpu_custom_call.1} parent=1 // pred_fallthru
      _
    // Predicated region
    $region26: #{tpu_custom_call.1} parent=1 // pred_check
      _
    $region27: #{tpu_custom_call.1} parent=1 // pred_check_branch
      %55 = sbr.rel (0) target = $region29
    $region28: #{tpu_custom_call.1} parent=1 // pred_region
      %56 = dma.done [#allocation6], 4096
    $region29: #{tpu_custom_call.1} parent=1 // pred_fallthru
      _
    // Predicated region
    $region30: #{tpu_custom_call.1} parent=1 // pred_check
      _
    $region31: #{tpu_custom_call.1} parent=1 // pred_check_branch
      %58 = sbr.rel (0) target = $region33
    $region32: #{tpu_custom_call.1} parent=1 // pred_region
      %59 = dma.done [#allocation6], 2048
    $region33: #{tpu_custom_call.1} parent=1 // pred_fallthru
      _
    %v60 = vld [vmem:[#allocation2] sm:$0xff]
    %v61 = vld [vmem:[#allocation2 + $0x8] sm:$0xff]
    %v62 = vld [vmem:[#allocation5] sm:$0xff]
    %v63 = vld [vmem:[#allocation5 + $0x8] sm:$0xff]
    %v64 = vld [vmem:[#allocation5 + $0x10] sm:$0xff]
    %v65 = vld [vmem:[#allocation5 + $0x18] sm:$0xff]
    %v66 = vld [vmem:[#allocation5 + $0x20] sm:$0xff]
    %v67 = vld [vmem:[#allocation5 + $0x28] sm:$0xff]
    %v68 = vld [vmem:[#allocation5 + $0x30] sm:$0xff]
    %v69 = vld [vmem:[#allocation5 + $0x38] sm:$0xff]
    %v70 = vld [vmem:[#allocation5 + $0x40] sm:$0xff]
    %v71 = vld [vmem:[#allocation5 + $0x48] sm:$0xff]
    %v72 = vld [vmem:[#allocation5 + $0x50] sm:$0xff]
    %v73 = vld [vmem:[#allocation5 + $0x58] sm:$0xff]
    %v74 = vld [vmem:[#allocation5 + $0x60] sm:$0xff]
    %v75 = vld [vmem:[#allocation5 + $0x68] sm:$0xff]
    %v76 = vld [vmem:[#allocation5 + $0x70] sm:$0xff]
    %v77 = vld [vmem:[#allocation5 + $0x78] sm:$0xff]
    %v78 = vld [vmem:[#allocation5 + $0x80] sm:$0xff]
    %v79 = vld [vmem:[#allocation5 + $0x88] sm:$0xff]
    %v80 = vld [vmem:[#allocation5 + $0x90] sm:$0xff]
    %v81 = vld [vmem:[#allocation5 + $0x98] sm:$0xff]
    %v82 = vld [vmem:[#allocation5 + $0xa0] sm:$0xff]
    %v83 = vld [vmem:[#allocation5 + $0xa8] sm:$0xff]
    %v84 = vld [vmem:[#allocation5 + $0xb0] sm:$0xff]
    %v85 = vld [vmem:[#allocation5 + $0xb8] sm:$0xff]
    %v86 = vld [vmem:[#allocation5 + $0xc0] sm:$0xff]
    %v87 = vld [vmem:[#allocation5 + $0xc8] sm:$0xff]
    %v88 = vld [vmem:[#allocation5 + $0xd0] sm:$0xff]
    %v89 = vld [vmem:[#allocation5 + $0xd8] sm:$0xff]
    %v90 = vld [vmem:[#allocation5 + $0xe0] sm:$0xff]
    %v91 = vld [vmem:[#allocation5 + $0xe8] sm:$0xff]
    %v92 = vld [vmem:[#allocation5 + $0xf0] sm:$0xff]
    %v93 = vld [vmem:[#allocation5 + $0xf8] sm:$0xff]
    %v94 = vld [vmem:[%s2] sm:$0x1]
    %v96 = vlaneseq
    %v97 = vshrl.u32 %v96, 7
    %v98 = vsub.s32 0, %v97
    %v99 = vrot.slane %v94, %v98
    %101 = vmatprep.subr.mxu0 0.0
    %102 = vmatpush1.msra.mxu0 %v62
    %103 = vmatprep.subr.mxu0 0.0
    %104 = vmatpush1.msra.mxu0 %v63
    %105 = vmatprep.subr.mxu0 0.0
    %106 = vmatpush1.msra.mxu0 %v64
    %107 = vmatprep.subr.mxu0 0.0
    %108 = vmatpush1.msra.mxu0 %v65
    %109 = vmatprep.subr.mxu0 0.0
    %110 = vmatpush1.msra.mxu0 %v66
    %111 = vmatprep.subr.mxu0 0.0
    %112 = vmatpush1.msra.mxu0 %v67
    %113 = vmatprep.subr.mxu0 0.0
    %114 = vmatpush1.msra.mxu0 %v68
    %115 = vmatprep.subr.mxu0 0.0
    %116 = vmatpush1.msra.mxu0 %v69
    %117 = vmatprep.subr.mxu0 0.0
    %118 = vmatpush1.msra.mxu0 %v70
    %119 = vmatprep.subr.mxu0 0.0
    %120 = vmatpush1.msra.mxu0 %v71
    %121 = vmatprep.subr.mxu0 0.0
    %122 = vmatpush1.msra.mxu0 %v72
    %123 = vmatprep.subr.mxu0 0.0
    %124 = vmatpush1.msra.mxu0 %v73
    %125 = vmatprep.subr.mxu0 0.0
    %126 = vmatpush1.msra.mxu0 %v74
    %127 = vmatprep.subr.mxu0 0.0
    %128 = vmatpush1.msra.mxu0 %v75
    %129 = vmatprep.subr.mxu0 0.0
    %130 = vmatpush1.msra.mxu0 %v76
    %131 = vmatprep.subr.mxu0 0.0
    %132 = vmatpush1.msra.mxu0 %v77
    %133 = vmatprep.subr.mxu0 0.0
    %134 = vmatpush1.msra.mxu0 %v78
    %135 = vmatprep.subr.mxu0 0.0
    %136 = vmatpush1.msra.mxu0 %v79
    %137 = vmatprep.subr.mxu0 0.0
    %138 = vmatpush1.msra.mxu0 %v80
    %139 = vmatprep.subr.mxu0 0.0
    %140 = vmatpush1.msra.mxu0 %v81
    %141 = vmatprep.subr.mxu0 0.0
    %142 = vmatpush1.msra.mxu0 %v82
    %143 = vmatprep.subr.mxu0 0.0
    %144 = vmatpush1.msra.mxu0 %v83
    %145 = vmatprep.subr.mxu0 0.0
    %146 = vmatpush1.msra.mxu0 %v84
    %147 = vmatprep.subr.mxu0 0.0
    %148 = vmatpush1.msra.mxu0 %v85
    %149 = vmatprep.subr.mxu0 0.0
    %150 = vmatpush1.msra.mxu0 %v86
    %151 = vmatprep.subr.mxu0 0.0
    %152 = vmatpush1.msra.mxu0 %v87
    %153 = vmatprep.subr.mxu0 0.0
    %154 = vmatpush1.msra.mxu0 %v88
    %155 = vmatprep.subr.mxu0 0.0
    %156 = vmatpush1.msra.mxu0 %v89
    %157 = vmatprep.subr.mxu0 0.0
    %158 = vmatpush1.msra.mxu0 %v90
    %159 = vmatprep.subr.mxu0 0.0
    %160 = vmatpush1.msra.mxu0 %v91
    %161 = vmatprep.subr.mxu0 0.0
    %162 = vmatpush1.msra.mxu0 %v92
    %163 = vmatprep.subr.mxu0 0.0
    %164 = vmatpush1.msra.mxu0 %v93
    %165 = vmatprep.mubr.f32.mxu0 %v61
    %166 = vmatmul.mubr.f32.gmra.mrb[0].mxu0 %v60
    %v167 = vpop.f32.mrb[0].mxu0
    %v168 = vadd.f32 %v99, %v167
    %v169 = vpop.f32.mrb[0].mxu0
    %170 = vdwg.mxu0
    %v171 = vld [vmem:[#allocation7] sm:$0xff]
    %v172 = vld [vmem:[#allocation7 + $0x8] sm:$0xff]
    %v173 = vld [vmem:[#allocation7 + $0x10] sm:$0xff]
    %v174 = vld [vmem:[#allocation7 + $0x18] sm:$0xff]
    %v175 = vld [vmem:[#allocation7 + $0x20] sm:$0xff]
    %v176 = vld [vmem:[#allocation7 + $0x28] sm:$0xff]
    %v177 = vld [vmem:[#allocation7 + $0x30] sm:$0xff]
    %v178 = vld [vmem:[#allocation7 + $0x38] sm:$0xff]
    %v179 = vld [vmem:[#allocation7 + $0x40] sm:$0xff]
    %v180 = vld [vmem:[#allocation7 + $0x48] sm:$0xff]
    %v181 = vld [vmem:[#allocation7 + $0x50] sm:$0xff]
    %v182 = vld [vmem:[#allocation7 + $0x58] sm:$0xff]
    %v183 = vld [vmem:[#allocation7 + $0x60] sm:$0xff]
    %v184 = vld [vmem:[#allocation7 + $0x68] sm:$0xff]
    %v185 = vld [vmem:[#allocation7 + $0x70] sm:$0xff]
    %v186 = vld [vmem:[#allocation7 + $0x78] sm:$0xff]
    %v187 = vld [vmem:[%s4] sm:$0x1]
    %v188 = vmul.f32 %v168, 0.5
    %v189 = vadd.f32 %v188, 0.0
    %vm190 = vcmp.ge.f32.partialorder %v189, 1.0
    %v191 = vsel %vm190, 1.0, 0.0
    %v192 = vsel %vm190, 0.0, %v189
    %v194 = vlaneseq
    %v195 = vshrl.u32 %v194, 7
    %v196 = vsub.s32 0, %v195
    %v197 = vrot.slane %v187, %v196
    %199 = vmatprep.subr.mxu0 0.0
    %200 = vmatpush1.msra.mxu0 %v171
    %201 = vmatprep.subr.mxu0 0.0
    %202 = vmatpush1.msra.mxu0 %v172
    %203 = vmatprep.subr.mxu0 0.0
    %204 = vmatpush1.msra.mxu0 %v173
    %205 = vmatprep.subr.mxu0 0.0
    %206 = vmatpush1.msra.mxu0 %v174
    %207 = vmatprep.subr.mxu0 0.0
    %208 = vmatpush1.msra.mxu0 %v175
    %209 = vmatprep.subr.mxu0 0.0
    %210 = vmatpush1.msra.mxu0 %v176
    %211 = vmatprep.subr.mxu0 0.0
    %212 = vmatpush1.msra.mxu0 %v177
    %213 = vmatprep.subr.mxu0 0.0
    %214 = vmatpush1.msra.mxu0 %v178
    %215 = vmatprep.subr.mxu0 0.0
    %216 = vmatpush1.msra.mxu0 %v179
    %217 = vmatprep.subr.mxu0 0.0
    %218 = vmatpush1.msra.mxu0 %v180
    %219 = vmatprep.subr.mxu0 0.0
    %220 = vmatpush1.msra.mxu0 %v181
    %221 = vmatprep.subr.mxu0 0.0
    %222 = vmatpush1.msra.mxu0 %v182
    %223 = vmatprep.subr.mxu0 0.0
    %224 = vmatpush1.msra.mxu0 %v183
    %225 = vmatprep.subr.mxu0 0.0
    %226 = vmatpush1.msra.mxu0 %v184
    %227 = vmatprep.subr.mxu0 0.0
    %228 = vmatpush1.msra.mxu0 %v185
    %229 = vmatprep.subr.mxu0 0.0
    %230 = vmatpush1.msra.mxu0 %v186
    %231 = vmatprep.subr.mxu0 0.0
    %232 = vmatpush1.msra.mxu0 0.0
    %233 = vmatprep.subr.mxu0 0.0
    %234 = vmatpush1.msra.mxu0 0.0
    %235 = vmatprep.subr.mxu0 0.0
    %236 = vmatpush1.msra.mxu0 0.0
    %237 = vmatprep.subr.mxu0 0.0
    %238 = vmatpush1.msra.mxu0 0.0
    %239 = vmatprep.subr.mxu0 0.0
    %240 = vmatpush1.msra.mxu0 0.0
    %241 = vmatprep.subr.mxu0 0.0
    %242 = vmatpush1.msra.mxu0 0.0
    %243 = vmatprep.subr.mxu0 0.0
    %244 = vmatpush1.msra.mxu0 0.0
    %245 = vmatprep.subr.mxu0 0.0
    %246 = vmatpush1.msra.mxu0 0.0
    %247 = vmatprep.subr.mxu0 0.0
    %248 = vmatpush1.msra.mxu0 0.0
    %249 = vmatprep.subr.mxu0 0.0
    %250 = vmatpush1.msra.mxu0 0.0
    %251 = vmatprep.subr.mxu0 0.0
    %252 = vmatpush1.msra.mxu0 0.0
    %253 = vmatprep.subr.mxu0 0.0
    %254 = vmatpush1.msra.mxu0 0.0
    %255 = vmatprep.subr.mxu0 0.0
    %256 = vmatpush1.msra.mxu0 0.0
    %257 = vmatprep.subr.mxu0 0.0
    %258 = vmatpush1.msra.mxu0 0.0
    %259 = vmatprep.subr.mxu0 0.0
    %260 = vmatpush1.msra.mxu0 0.0
    %261 = vmatprep.subr.mxu0 0.0
    %262 = vmatpush1.msra.mxu0 0.0
    %263 = vmatprep.mubr.f32.mxu0 0.0
    %264 = vmatmul.mubr.f32.gmra.mrb[0].mxu0 %v191
    %v265 = vpop.f32.mrb[0].mxu0
    %v266 = vadd.f32 %v197, %v265
    %v267 = vpop.f32.mrb[0].mxu0
    %268 = vdwg.mxu0
    %v269 = vmul.f32 %v266, 0.5
    %v270 = vadd.f32 %v269, 0.0
    %vm271 = vcmp.ge.f32.partialorder %v270, 1.0
    %v272 = vsel %vm271, 1.0, 0.0
    %v273 = vadd.f32 %v272, 0.0
    %v274 = vsel %vm271, 0.0, %v270
    %v275 = vsub.f32 %v168, %v192
    %v276 = vmul.f32 %v275, 0.5
    %v277 = vadd.f32 %v192, %v276
    %vm278 = vcmp.ge.f32.partialorder %v277, 1.0
    %v279 = vsel %vm278, 1.0, 0.0
    %v280 = vsel %vm278, 0.0, %v277
    %281 = vmatprep.subr.mxu0 0.0
    %282 = vmatpush1.msra.mxu0 %v171
    %283 = vmatprep.subr.mxu0 0.0
    %284 = vmatpush1.msra.mxu0 %v172
    %285 = vmatprep.subr.mxu0 0.0
    %286 = vmatpush1.msra.mxu0 %v173
    %287 = vmatprep.subr.mxu0 0.0
    %288 = vmatpush1.msra.mxu0 %v174
    %289 = vmatprep.subr.mxu0 0.0
    %290 = vmatpush1.msra.mxu0 %v175
    %291 = vmatprep.subr.mxu0 0.0
    %292 = vmatpush1.msra.mxu0 %v176
    %293 = vmatprep.subr.mxu0 0.0
    %294 = vmatpush1.msra.mxu0 %v177
    %295 = vmatprep.subr.mxu0 0.0
    %296 = vmatpush1.msra.mxu0 %v178
    %297 = vmatprep.subr.mxu0 0.0
    %298 = vmatpush1.msra.mxu0 %v179
    %299 = vmatprep.subr.mxu0 0.0
    %300 = vmatpush1.msra.mxu0 %v180
    %301 = vmatprep.subr.mxu0 0.0
    %302 = vmatpush1.msra.mxu0 %v181
    %303 = vmatprep.subr.mxu0 0.0
    %304 = vmatpush1.msra.mxu0 %v182
    %305 = vmatprep.subr.mxu0 0.0
    %306 = vmatpush1.msra.mxu0 %v183
    %307 = vmatprep.subr.mxu0 0.0
    %308 = vmatpush1.msra.mxu0 %v184
    %309 = vmatprep.subr.mxu0 0.0
    %310 = vmatpush1.msra.mxu0 %v185
    %311 = vmatprep.subr.mxu0 0.0
    %312 = vmatpush1.msra.mxu0 %v186
    %313 = vmatprep.subr.mxu0 0.0
    %314 = vmatpush1.msra.mxu0 0.0
    %315 = vmatprep.subr.mxu0 0.0
    %316 = vmatpush1.msra.mxu0 0.0
    %317 = vmatprep.subr.mxu0 0.0
    %318 = vmatpush1.msra.mxu0 0.0
    %319 = vmatprep.subr.mxu0 0.0
    %320 = vmatpush1.msra.mxu0 0.0
    %321 = vmatprep.subr.mxu0 0.0
    %322 = vmatpush1.msra.mxu0 0.0
    %323 = vmatprep.subr.mxu0 0.0
    %324 = vmatpush1.msra.mxu0 0.0
    %325 = vmatprep.subr.mxu0 0.0
    %326 = vmatpush1.msra.mxu0 0.0
    %327 = vmatprep.subr.mxu0 0.0
    %328 = vmatpush1.msra.mxu0 0.0
    %329 = vmatprep.subr.mxu0 0.0
    %330 = vmatpush1.msra.mxu0 0.0
    %331 = vmatprep.subr.mxu0 0.0
    %332 = vmatpush1.msra.mxu0 0.0
    %333 = vmatprep.subr.mxu0 0.0
    %334 = vmatpush1.msra.mxu0 0.0
    %335 = vmatprep.subr.mxu0 0.0
    %336 = vmatpush1.msra.mxu0 0.0
    %337 = vmatprep.subr.mxu0 0.0
    %338 = vmatpush1.msra.mxu0 0.0
    %339 = vmatprep.subr.mxu0 0.0
    %340 = vmatpush1.msra.mxu0 0.0
    %341 = vmatprep.subr.mxu0 0.0
    %342 = vmatpush1.msra.mxu0 0.0
    %343 = vmatprep.subr.mxu0 0.0
    %344 = vmatpush1.msra.mxu0 0.0
    %345 = vmatprep.mubr.f32.mxu0 0.0
    %346 = vmatmul.mubr.f32.gmra.mrb[0].mxu0 %v279
    %v347 = vpop.f32.mrb[0].mxu0
    %v348 = vadd.f32 %v197, %v347
    %v349 = vpop.f32.mrb[0].mxu0
    %350 = vdwg.mxu0
    %v351 = vsub.f32 %v348, %v274
    %v352 = vmul.f32 %v351, 0.5
    %v353 = vadd.f32 %v274, %v352
    %vm354 = vcmp.ge.f32.partialorder %v353, 1.0
    %v355 = vsel %vm354, 1.0, 0.0
    %v356 = vadd.f32 %v273, %v355
    %v357 = vsel %vm354, 0.0, %v353
    %v358 = vsub.f32 %v168, %v280
    %v359 = vmul.f32 %v358, 0.5
    %v360 = vadd.f32 %v280, %v359
    %vm361 = vcmp.ge.f32.partialorder %v360, 1.0
    %v362 = vsel %vm361, 1.0, 0.0
    %v363 = vsel %vm361, 0.0, %v360
    %364 = vmatprep.subr.mxu0 0.0
    %365 = vmatpush1.msra.mxu0 %v171
    %366 = vmatprep.subr.mxu0 0.0
    %367 = vmatpush1.msra.mxu0 %v172
    %368 = vmatprep.subr.mxu0 0.0
    %369 = vmatpush1.msra.mxu0 %v173
    %370 = vmatprep.subr.mxu0 0.0
    %371 = vmatpush1.msra.mxu0 %v174
    %372 = vmatprep.subr.mxu0 0.0
    %373 = vmatpush1.msra.mxu0 %v175
    %374 = vmatprep.subr.mxu0 0.0
    %375 = vmatpush1.msra.mxu0 %v176
    %376 = vmatprep.subr.mxu0 0.0
    %377 = vmatpush1.msra.mxu0 %v177
    %378 = vmatprep.subr.mxu0 0.0
    %379 = vmatpush1.msra.mxu0 %v178
    %380 = vmatprep.subr.mxu0 0.0
    %381 = vmatpush1.msra.mxu0 %v179
    %382 = vmatprep.subr.mxu0 0.0
    %383 = vmatpush1.msra.mxu0 %v180
    %384 = vmatprep.subr.mxu0 0.0
    %385 = vmatpush1.msra.mxu0 %v181
    %386 = vmatprep.subr.mxu0 0.0
    %387 = vmatpush1.msra.mxu0 %v182
    %388 = vmatprep.subr.mxu0 0.0
    %389 = vmatpush1.msra.mxu0 %v183
    %390 = vmatprep.subr.mxu0 0.0
    %391 = vmatpush1.msra.mxu0 %v184
    %392 = vmatprep.subr.mxu0 0.0
    %393 = vmatpush1.msra.mxu0 %v185
    %394 = vmatprep.subr.mxu0 0.0
    %395 = vmatpush1.msra.mxu0 %v186
    %396 = vmatprep.subr.mxu0 0.0
    %397 = vmatpush1.msra.mxu0 0.0
    %398 = vmatprep.subr.mxu0 0.0
    %399 = vmatpush1.msra.mxu0 0.0
    %400 = vmatprep.subr.mxu0 0.0
    %401 = vmatpush1.msra.mxu0 0.0
    %402 = vmatprep.subr.mxu0 0.0
    %403 = vmatpush1.msra.mxu0 0.0
    %404 = vmatprep.subr.mxu0 0.0
    %405 = vmatpush1.msra.mxu0 0.0
    %406 = vmatprep.subr.mxu0 0.0
    %407 = vmatpush1.msra.mxu0 0.0
    %408 = vmatprep.subr.mxu0 0.0
    %409 = vmatpush1.msra.mxu0 0.0
    %410 = vmatprep.subr.mxu0 0.0
    %411 = vmatpush1.msra.mxu0 0.0
    %412 = vmatprep.subr.mxu0 0.0
    %413 = vmatpush1.msra.mxu0 0.0
    %414 = vmatprep.subr.mxu0 0.0
    %415 = vmatpush1.msra.mxu0 0.0
    %416 = vmatprep.subr.mxu0 0.0
    %417 = vmatpush1.msra.mxu0 0.0
    %418 = vmatprep.subr.mxu0 0.0
    %419 = vmatpush1.msra.mxu0 0.0
    %420 = vmatprep.subr.mxu0 0.0
    %421 = vmatpush1.msra.mxu0 0.0
    %422 = vmatprep.subr.mxu0 0.0
    %423 = vmatpush1.msra.mxu0 0.0
    %424 = vmatprep.subr.mxu0 0.0
    %425 = vmatpush1.msra.mxu0 0.0
    %426 = vmatprep.subr.mxu0 0.0
    %427 = vmatpush1.msra.mxu0 0.0
    %428 = vmatprep.mubr.f32.mxu0 0.0
    %429 = vmatmul.mubr.f32.gmra.mrb[0].mxu0 %v362
    %v430 = vpop.f32.mrb[0].mxu0
    %v431 = vadd.f32 %v197, %v430
    %v432 = vpop.f32.mrb[0].mxu0
    %433 = vdwg.mxu0
    %v434 = vsub.f32 %v431, %v357
    %v435 = vmul.f32 %v434, 0.5
    %v436 = vadd.f32 %v357, %v435
    %vm437 = vcmp.ge.f32.partialorder %v436, 1.0
    %v438 = vsel %vm437, 1.0, 0.0
    %v439 = vadd.f32 %v356, %v438
    %v440 = vsel %vm437, 0.0, %v436
    %v441 = vsub.f32 %v168, %v363
    %v442 = vmul.f32 %v441, 0.5
    %v443 = vadd.f32 %v363, %v442
    %vm444 = vcmp.ge.f32.partialorder %v443, 1.0
    %v445 = vsel %vm444, 1.0, 0.0
    %446 = vmatprep.subr.mxu0 0.0
    %447 = vmatpush1.msra.mxu0 %v171
    %448 = vmatprep.subr.mxu0 0.0
    %449 = vmatpush1.msra.mxu0 %v172
    %450 = vmatprep.subr.mxu0 0.0
    %451 = vmatpush1.msra.mxu0 %v173
    %452 = vmatprep.subr.mxu0 0.0
    %453 = vmatpush1.msra.mxu0 %v174
    %454 = vmatprep.subr.mxu0 0.0
    %455 = vmatpush1.msra.mxu0 %v175
    %456 = vmatprep.subr.mxu0 0.0
    %457 = vmatpush1.msra.mxu0 %v176
    %458 = vmatprep.subr.mxu0 0.0
    %459 = vmatpush1.msra.mxu0 %v177
    %460 = vmatprep.subr.mxu0 0.0
    %461 = vmatpush1.msra.mxu0 %v178
    %462 = vmatprep.subr.mxu0 0.0
    %463 = vmatpush1.msra.mxu0 %v179
    %464 = vmatprep.subr.mxu0 0.0
    %465 = vmatpush1.msra.mxu0 %v180
    %466 = vmatprep.subr.mxu0 0.0
    %467 = vmatpush1.msra.mxu0 %v181
    %468 = vmatprep.subr.mxu0 0.0
    %469 = vmatpush1.msra.mxu0 %v182
    %470 = vmatprep.subr.mxu0 0.0
    %471 = vmatpush1.msra.mxu0 %v183
    %472 = vmatprep.subr.mxu0 0.0
    %473 = vmatpush1.msra.mxu0 %v184
    %474 = vmatprep.subr.mxu0 0.0
    %475 = vmatpush1.msra.mxu0 %v185
    %476 = vmatprep.subr.mxu0 0.0
    %477 = vmatpush1.msra.mxu0 %v186
    %478 = vmatprep.subr.mxu0 0.0
    %479 = vmatpush1.msra.mxu0 0.0
    %480 = vmatprep.subr.mxu0 0.0
    %481 = vmatpush1.msra.mxu0 0.0
    %482 = vmatprep.subr.mxu0 0.0
    %483 = vmatpush1.msra.mxu0 0.0
    %484 = vmatprep.subr.mxu0 0.0
    %485 = vmatpush1.msra.mxu0 0.0
    %486 = vmatprep.subr.mxu0 0.0
    %487 = vmatpush1.msra.mxu0 0.0
    %488 = vmatprep.subr.mxu0 0.0
    %489 = vmatpush1.msra.mxu0 0.0
    %490 = vmatprep.subr.mxu0 0.0
    %491 = vmatpush1.msra.mxu0 0.0
    %492 = vmatprep.subr.mxu0 0.0
    %493 = vmatpush1.msra.mxu0 0.0
    %494 = vmatprep.subr.mxu0 0.0
    %495 = vmatpush1.msra.mxu0 0.0
    %496 = vmatprep.subr.mxu0 0.0
    %497 = vmatpush1.msra.mxu0 0.0
    %498 = vmatprep.subr.mxu0 0.0
    %499 = vmatpush1.msra.mxu0 0.0
    %500 = vmatprep.subr.mxu0 0.0
    %501 = vmatpush1.msra.mxu0 0.0
    %502 = vmatprep.subr.mxu0 0.0
    %503 = vmatpush1.msra.mxu0 0.0
    %504 = vmatprep.subr.mxu0 0.0
    %505 = vmatpush1.msra.mxu0 0.0
    %506 = vmatprep.subr.mxu0 0.0
    %507 = vmatpush1.msra.mxu0 0.0
    %508 = vmatprep.subr.mxu0 0.0
    %509 = vmatpush1.msra.mxu0 0.0
    %510 = vmatprep.mubr.f32.mxu0 0.0
    %511 = vmatmul.mubr.f32.gmra.mrb[0].mxu0 %v445
    %v512 = vpop.f32.mrb[0].mxu0
    %v513 = vadd.f32 %v197, %v512
    %v514 = vpop.f32.mrb[0].mxu0
    %515 = vdwg.mxu0
    %v516 = vsub.f32 %v513, %v440
    %v517 = vmul.f32 %v516, 0.5
    %v518 = vadd.f32 %v440, %v517
    %vm519 = vcmp.ge.f32.partialorder %v518, 1.0
    %v520 = vsel %vm519, 1.0, 0.0
    %v521 = vadd.f32 %v439, %v520
    %v522 = vmul.f32 %v521, 0.25
    %523 = vst [vmem:[#allocation8] sm:$0xff] %v522
    // Predicated region
    $region34: #{tpu_custom_call.1} parent=1 // pred_check
      _
    $region35: #{tpu_custom_call.1} parent=1 // pred_check_branch
      %525 = sbr.rel (0) target = $region37
    $region36: #{tpu_custom_call.1} parent=1 // pred_region
      %s527 = ssub.s32 128, 128
      %528 = vsyncadd [#allocation4], %s527
      %s530 = sshll.u32 [#allocation8], 4
      %s531 = int_to_ptr.vmem [resolvable:$true] %s530
      %533 = dma.vmem_to_hbm [thread:$0]  %s531, 128, %s5, [#allocation4]
    $region37: #{tpu_custom_call.1} parent=1 // pred_fallthru
      _
    // Predicated region
    $region38: #{tpu_custom_call.1} parent=1 // pred_check
      _
    $region39: #{tpu_custom_call.1} parent=1 // pred_check_branch
      %535 = sbr.rel (0) target = $region41
    $region40: #{tpu_custom_call.1} parent=1 // pred_region
      %536 = dma.done [#allocation4], 128
    $region41: #{tpu_custom_call.1} parent=1 // pred_fallthru
      _
    %537 = vsyncpa [#allocation3], 1
    %538 = vsyncpa [#allocation6], 1
    %539 = vsyncpa [#allocation4], 1

// kernel: tpu_custom_call.1
$region0: #{tpu_custom_call.1}
  #allocation0 [shape = 'u32[]', space=smem, size = 0x4, offset = 0x4, fixed_abs, tag = 'smem constant byte address 0x4 - core index']
  #allocation1 [shape = 'u32[144,128]{1,0:T(1,128)}', space=vmem, size = 0x12000, scoped, tag = 'internal scratch']
  %s0 = inlined_call_operand.hbm [shape: f32[8,256], index: 0, kind: input, shape index: {}]
  %s1 = inlined_call_operand.hbm [shape: f32[256,128], index: 1, kind: input, shape index: {}]
  %s2 = inlined_call_operand.vmem [shape: f32[1,128], index: 2, kind: input, shape index: {}]
  %s3 = inlined_call_operand.hbm [shape: f32[128,128], index: 3, kind: input, shape index: {}]
  %s4 = inlined_call_operand.vmem [shape: f32[1,128], index: 4, kind: input, shape index: {}]
  %s5 = inlined_call_operand.hbm [shape: f32[8,128], index: 5, kind: output, shape index: {}]
  %s6 = sld [smem:[#allocation0]]
  $region42: #{tpu_custom_call.1} parent=0
    _
  %s8 = ssub.s32 1, %s6
  %s9 = scalar_select 0, %s8, %s6
  $region1: #{tpu_custom_call.1} parent=0
    #allocation2 [shape = 'u8[8192]{0}', space=vmem, size = 0x2000, scoped, tag = 'input window, operand 0, single buffered']
    #allocation3 [shape = 's32[1]{0}', space=sflag, size = 0x4, scoped, tag = 'scoped memory for tpu_custom_call.1']
    #allocation4 [shape = 's32[1]{0}', space=sflag, size = 0x4, scoped, tag = 'scoped memory for tpu_custom_call.1']
    #allocation5 [shape = 'u8[131072]{0}', space=vmem, size = 0x20000, scoped, tag = 'input window, operand 1, single buffered']
    #allocation6 [shape = 's32[1]{0}', space=sflag, size = 0x4, scoped, tag = 'scoped memory for tpu_custom_call.1']
    #allocation7 [shape = 'u8[65536]{0}', space=vmem, size = 0x10000, scoped, tag = 'input window, operand 3, single buffered']
    #allocation8 [shape = 'u8[4096]{0}', space=vmem, size = 0x1000, scoped, tag = 'output window, operand 0, single buffered']
    %10 = vsyncpa [#allocation3], 0
    %11 = vsyncpa [#allocation6], 0
    %12 = vsyncpa [#allocation4], 0
    // Predicated region
    $region2: #{tpu_custom_call.1} parent=1 // pred_check
      _
    $region3: #{tpu_custom_call.1} parent=1 // pred_check_branch
      %14 = sbr.rel (0) target = $region5
    $region4: #{tpu_custom_call.1} parent=1 // pred_region
      %s16 = ssub.s32 256, 256
      %17 = vsyncadd [#allocation3], %s16
      %s19 = sshll.u32 [#allocation2], 4
      %s20 = int_to_ptr.vmem [resolvable:$true] %s19
      %22 = dma.hbm_to_vmem [thread:$0]  %s0, 256, %s20, [#allocation3]
    $region5: #{tpu_custom_call.1} parent=1 // pred_fallthru
      _
    // Predicated region
    $region6: #{tpu_custom_call.1} parent=1 // pred_check
      _
    $region7: #{tpu_custom_call.1} parent=1 // pred_check_branch
      %24 = sbr.rel (0) target = $region9
    $region8: #{tpu_custom_call.1} parent=1 // pred_region
      %s26 = ssub.s32 4096, 4096
      %27 = vsyncadd [#allocation6], %s26
      %s28 = sshll.u32 [#allocation5], 4
      %s29 = int_to_ptr.vmem [resolvable:$true] %s28
      %34 = dma.hbm_to_vmem [thread:$0]  %s1, 4096, %s29, [#allocation6], 128, 128, 8
    $region9: #{tpu_custom_call.1} parent=1 // pred_fallthru
      _
    // Predicated region
    $region10: #{tpu_custom_call.1} parent=1 // pred_check
      _
    $region11: #{tpu_custom_call.1} parent=1 // pred_check_branch
      %36 = sbr.rel (0) target = $region13
    $region12: #{tpu_custom_call.1} parent=1 // pred_region
      _
    $region13: #{tpu_custom_call.1} parent=1 // pred_fallthru
      _
    // Predicated region
    $region14: #{tpu_custom_call.1} parent=1 // pred_check
      _
    $region15: #{tpu_custom_call.1} parent=1 // pred_check_branch
      %38 = sbr.rel (0) target = $region17
    $region16: #{tpu_custom_call.1} parent=1 // pred_region
      %s40 = ssub.s32 2048, 2048
      %41 = vsyncadd [#allocation6], %s40
      %s42 = sshll.u32 [#allocation7], 4
      %s43 = int_to_ptr.vmem [resolvable:$true] %s42
      %48 = dma.hbm_to_vmem [thread:$0]  %s3, 2048, %s43, [#allocation6], 128, 128, 8
    $region17: #{tpu_custom_call.1} parent=1 // pred_fallthru
      _
    // Predicated region
    $region18: #{tpu_custom_call.1} parent=1 // pred_check
      _
    $region19: #{tpu_custom_call.1} parent=1 // pred_check_branch
      %50 = sbr.rel (0) target = $region21
    $region20: #{tpu_custom_call.1} parent=1 // pred_region
      _
    $region21: #{tpu_custom_call.1} parent=1 // pred_fallthru
      _
    // Predicated region
    $region22: #{tpu_custom_call.1} parent=1 // pred_check
      _
    $region23: #{tpu_custom_call.1} parent=1 // pred_check_branch
      %52 = sbr.rel (0) target = $region25
    $region24: #{tpu_custom_call.1} parent=1 // pred_region
      %53 = dma.done [#allocation3], 256
    $region25: #{tpu_custom_call.1} parent=1 // pred_fallthru
      _
    // Predicated region
    $region26: #{tpu_custom_call.1} parent=1 // pred_check
      _
    $region27: #{tpu_custom_call.1} parent=1 // pred_check_branch
      %55 = sbr.rel (0) target = $region29
    $region28: #{tpu_custom_call.1} parent=1 // pred_region
      %56 = dma.done [#allocation6], 4096
    $region29: #{tpu_custom_call.1} parent=1 // pred_fallthru
      _
    // Predicated region
    $region30: #{tpu_custom_call.1} parent=1 // pred_check
      _
    $region31: #{tpu_custom_call.1} parent=1 // pred_check_branch
      %58 = sbr.rel (0) target = $region33
    $region32: #{tpu_custom_call.1} parent=1 // pred_region
      %59 = dma.done [#allocation6], 2048
    $region33: #{tpu_custom_call.1} parent=1 // pred_fallthru
      _
    %v60 = vld [vmem:[#allocation2] sm:$0xff]
    %v61 = vld [vmem:[#allocation2 + $0x8] sm:$0xff]
    %v62 = vld [vmem:[#allocation5] sm:$0xff]
    %v63 = vld [vmem:[#allocation5 + $0x8] sm:$0xff]
    %v64 = vld [vmem:[#allocation5 + $0x10] sm:$0xff]
    %v65 = vld [vmem:[#allocation5 + $0x18] sm:$0xff]
    %v66 = vld [vmem:[#allocation5 + $0x20] sm:$0xff]
    %v67 = vld [vmem:[#allocation5 + $0x28] sm:$0xff]
    %v68 = vld [vmem:[#allocation5 + $0x30] sm:$0xff]
    %v69 = vld [vmem:[#allocation5 + $0x38] sm:$0xff]
    %v70 = vld [vmem:[#allocation5 + $0x40] sm:$0xff]
    %v71 = vld [vmem:[#allocation5 + $0x48] sm:$0xff]
    %v72 = vld [vmem:[#allocation5 + $0x50] sm:$0xff]
    %v73 = vld [vmem:[#allocation5 + $0x58] sm:$0xff]
    %v74 = vld [vmem:[#allocation5 + $0x60] sm:$0xff]
    %v75 = vld [vmem:[#allocation5 + $0x68] sm:$0xff]
    %v76 = vld [vmem:[#allocation5 + $0x70] sm:$0xff]
    %v77 = vld [vmem:[#allocation5 + $0x78] sm:$0xff]
    %v78 = vld [vmem:[#allocation5 + $0x80] sm:$0xff]
    %v79 = vld [vmem:[#allocation5 + $0x88] sm:$0xff]
    %v80 = vld [vmem:[#allocation5 + $0x90] sm:$0xff]
    %v81 = vld [vmem:[#allocation5 + $0x98] sm:$0xff]
    %v82 = vld [vmem:[#allocation5 + $0xa0] sm:$0xff]
    %v83 = vld [vmem:[#allocation5 + $0xa8] sm:$0xff]
    %v84 = vld [vmem:[#allocation5 + $0xb0] sm:$0xff]
    %v85 = vld [vmem:[#allocation5 + $0xb8] sm:$0xff]
    %v86 = vld [vmem:[#allocation5 + $0xc0] sm:$0xff]
    %v87 = vld [vmem:[#allocation5 + $0xc8] sm:$0xff]
    %v88 = vld [vmem:[#allocation5 + $0xd0] sm:$0xff]
    %v89 = vld [vmem:[#allocation5 + $0xd8] sm:$0xff]
    %v90 = vld [vmem:[#allocation5 + $0xe0] sm:$0xff]
    %v91 = vld [vmem:[#allocation5 + $0xe8] sm:$0xff]
    %v92 = vld [vmem:[#allocation5 + $0xf0] sm:$0xff]
    %v93 = vld [vmem:[#allocation5 + $0xf8] sm:$0xff]
    %v94 = vld [vmem:[%s2] sm:$0x1]
    %v96 = vlaneseq
    %v97 = vshrl.u32 %v96, 7
    %v98 = vsub.s32 0, %v97
    %v99 = vrot.slane %v94, %v98
    %101 = vmatprep.subr.mxu0 0.0
    %102 = vmatpush1.msra.mxu0 %v62
    %103 = vmatprep.subr.mxu0 0.0
    %104 = vmatpush1.msra.mxu0 %v63
    %105 = vmatprep.subr.mxu0 0.0
    %106 = vmatpush1.msra.mxu0 %v64
    %107 = vmatprep.subr.mxu0 0.0
    %108 = vmatpush1.msra.mxu0 %v65
    %109 = vmatprep.subr.mxu0 0.0
    %110 = vmatpush1.msra.mxu0 %v66
    %111 = vmatprep.subr.mxu0 0.0
    %112 = vmatpush1.msra.mxu0 %v67
    %113 = vmatprep.subr.mxu0 0.0
    %114 = vmatpush1.msra.mxu0 %v68
    %115 = vmatprep.subr.mxu0 0.0
    %116 = vmatpush1.msra.mxu0 %v69
    %117 = vmatprep.subr.mxu0 0.0
    %118 = vmatpush1.msra.mxu0 %v70
    %119 = vmatprep.subr.mxu0 0.0
    %120 = vmatpush1.msra.mxu0 %v71
    %121 = vmatprep.subr.mxu0 0.0
    %122 = vmatpush1.msra.mxu0 %v72
    %123 = vmatprep.subr.mxu0 0.0
    %124 = vmatpush1.msra.mxu0 %v73
    %125 = vmatprep.subr.mxu0 0.0
    %126 = vmatpush1.msra.mxu0 %v74
    %127 = vmatprep.subr.mxu0 0.0
    %128 = vmatpush1.msra.mxu0 %v75
    %129 = vmatprep.subr.mxu0 0.0
    %130 = vmatpush1.msra.mxu0 %v76
    %131 = vmatprep.subr.mxu0 0.0
    %132 = vmatpush1.msra.mxu0 %v77
    %133 = vmatprep.subr.mxu0 0.0
    %134 = vmatpush1.msra.mxu0 %v78
    %135 = vmatprep.subr.mxu0 0.0
    %136 = vmatpush1.msra.mxu0 %v79
    %137 = vmatprep.subr.mxu0 0.0
    %138 = vmatpush1.msra.mxu0 %v80
    %139 = vmatprep.subr.mxu0 0.0
    %140 = vmatpush1.msra.mxu0 %v81
    %141 = vmatprep.subr.mxu0 0.0
    %142 = vmatpush1.msra.mxu0 %v82
    %143 = vmatprep.subr.mxu0 0.0
    %144 = vmatpush1.msra.mxu0 %v83
    %145 = vmatprep.subr.mxu0 0.0
    %146 = vmatpush1.msra.mxu0 %v84
    %147 = vmatprep.subr.mxu0 0.0
    %148 = vmatpush1.msra.mxu0 %v85
    %149 = vmatprep.subr.mxu0 0.0
    %150 = vmatpush1.msra.mxu0 %v86
    %151 = vmatprep.subr.mxu0 0.0
    %152 = vmatpush1.msra.mxu0 %v87
    %153 = vmatprep.subr.mxu0 0.0
    %154 = vmatpush1.msra.mxu0 %v88
    %155 = vmatprep.subr.mxu0 0.0
    %156 = vmatpush1.msra.mxu0 %v89
    %157 = vmatprep.subr.mxu0 0.0
    %158 = vmatpush1.msra.mxu0 %v90
    %159 = vmatprep.subr.mxu0 0.0
    %160 = vmatpush1.msra.mxu0 %v91
    %161 = vmatprep.subr.mxu0 0.0
    %162 = vmatpush1.msra.mxu0 %v92
    %163 = vmatprep.subr.mxu0 0.0
    %164 = vmatpush1.msra.mxu0 %v93
    %165 = vmatprep.mubr.f32.mxu0 %v61
    %166 = vmatmul.mubr.f32.gmra.mrb[0].mxu0 %v60
    %v167 = vpop.f32.mrb[0].mxu0
    %v168 = vadd.f32 %v99, %v167
    %v169 = vpop.f32.mrb[0].mxu0
    %170 = vdwg.mxu0
    %v171 = vld [vmem:[#allocation7] sm:$0xff]
    %v172 = vld [vmem:[#allocation7 + $0x8] sm:$0xff]
    %v173 = vld [vmem:[#allocation7 + $0x10] sm:$0xff]
    %v174 = vld [vmem:[#allocation7 + $0x18] sm:$0xff]
    %v175 = vld [vmem:[#allocation7 + $0x20] sm:$0xff]
    %v176 = vld [vmem:[#allocation7 + $0x28] sm:$0xff]
    %v177 = vld [vmem:[#allocation7 + $0x30] sm:$0xff]
    %v178 = vld [vmem:[#allocation7 + $0x38] sm:$0xff]
    %v179 = vld [vmem:[#allocation7 + $0x40] sm:$0xff]
    %v180 = vld [vmem:[#allocation7 + $0x48] sm:$0xff]
    %v181 = vld [vmem:[#allocation7 + $0x50] sm:$0xff]
    %v182 = vld [vmem:[#allocation7 + $0x58] sm:$0xff]
    %v183 = vld [vmem:[#allocation7 + $0x60] sm:$0xff]
    %v184 = vld [vmem:[#allocation7 + $0x68] sm:$0xff]
    %v185 = vld [vmem:[#allocation7 + $0x70] sm:$0xff]
    %v186 = vld [vmem:[#allocation7 + $0x78] sm:$0xff]
    %v187 = vld [vmem:[%s4] sm:$0x1]
    %v188 = vmul.f32 %v168, 0.5
    %v189 = vadd.f32 %v188, 0.0
    %vm190 = vcmp.ge.f32.partialorder %v189, 1.0
    %v191 = vsel %vm190, 1.0, 0.0
    %v192 = vsel %vm190, 0.0, %v189
    %v194 = vlaneseq
    %v195 = vshrl.u32 %v194, 7
    %v196 = vsub.s32 0, %v195
    %v197 = vrot.slane %v187, %v196
    %199 = vmatprep.subr.mxu0 0.0
    %200 = vmatpush1.msra.mxu0 %v171
    %201 = vmatprep.subr.mxu0 0.0
    %202 = vmatpush1.msra.mxu0 %v172
    %203 = vmatprep.subr.mxu0 0.0
    %204 = vmatpush1.msra.mxu0 %v173
    %205 = vmatprep.subr.mxu0 0.0
    %206 = vmatpush1.msra.mxu0 %v174
    %207 = vmatprep.subr.mxu0 0.0
    %208 = vmatpush1.msra.mxu0 %v175
    %209 = vmatprep.subr.mxu0 0.0
    %210 = vmatpush1.msra.mxu0 %v176
    %211 = vmatprep.subr.mxu0 0.0
    %212 = vmatpush1.msra.mxu0 %v177
    %213 = vmatprep.subr.mxu0 0.0
    %214 = vmatpush1.msra.mxu0 %v178
    %215 = vmatprep.subr.mxu0 0.0
    %216 = vmatpush1.msra.mxu0 %v179
    %217 = vmatprep.subr.mxu0 0.0
    %218 = vmatpush1.msra.mxu0 %v180
    %219 = vmatprep.subr.mxu0 0.0
    %220 = vmatpush1.msra.mxu0 %v181
    %221 = vmatprep.subr.mxu0 0.0
    %222 = vmatpush1.msra.mxu0 %v182
    %223 = vmatprep.subr.mxu0 0.0
    %224 = vmatpush1.msra.mxu0 %v183
    %225 = vmatprep.subr.mxu0 0.0
    %226 = vmatpush1.msra.mxu0 %v184
    %227 = vmatprep.subr.mxu0 0.0
    %228 = vmatpush1.msra.mxu0 %v185
    %229 = vmatprep.subr.mxu0 0.0
    %230 = vmatpush1.msra.mxu0 %v186
    %231 = vmatprep.subr.mxu0 0.0
    %232 = vmatpush1.msra.mxu0 0.0
    %233 = vmatprep.subr.mxu0 0.0
    %234 = vmatpush1.msra.mxu0 0.0
    %235 = vmatprep.subr.mxu0 0.0
    %236 = vmatpush1.msra.mxu0 0.0
    %237 = vmatprep.subr.mxu0 0.0
    %238 = vmatpush1.msra.mxu0 0.0
    %239 = vmatprep.subr.mxu0 0.0
    %240 = vmatpush1.msra.mxu0 0.0
    %241 = vmatprep.subr.mxu0 0.0
    %242 = vmatpush1.msra.mxu0 0.0
    %243 = vmatprep.subr.mxu0 0.0
    %244 = vmatpush1.msra.mxu0 0.0
    %245 = vmatprep.subr.mxu0 0.0
    %246 = vmatpush1.msra.mxu0 0.0
    %247 = vmatprep.subr.mxu0 0.0
    %248 = vmatpush1.msra.mxu0 0.0
    %249 = vmatprep.subr.mxu0 0.0
    %250 = vmatpush1.msra.mxu0 0.0
    %251 = vmatprep.subr.mxu0 0.0
    %252 = vmatpush1.msra.mxu0 0.0
    %253 = vmatprep.subr.mxu0 0.0
    %254 = vmatpush1.msra.mxu0 0.0
    %255 = vmatprep.subr.mxu0 0.0
    %256 = vmatpush1.msra.mxu0 0.0
    %257 = vmatprep.subr.mxu0 0.0
    %258 = vmatpush1.msra.mxu0 0.0
    %259 = vmatprep.subr.mxu0 0.0
    %260 = vmatpush1.msra.mxu0 0.0
    %261 = vmatprep.subr.mxu0 0.0
    %262 = vmatpush1.msra.mxu0 0.0
    %263 = vmatprep.mubr.f32.mxu0 0.0
    %264 = vmatmul.mubr.f32.gmra.mrb[0].mxu0 %v191
    %v265 = vpop.f32.mrb[0].mxu0
    %v266 = vadd.f32 %v197, %v265
    %v267 = vpop.f32.mrb[0].mxu0
    %268 = vdwg.mxu0
    %v269 = vmul.f32 %v266, 0.5
    %v270 = vadd.f32 %v269, 0.0
    %vm271 = vcmp.ge.f32.partialorder %v270, 1.0
    %v272 = vsel %vm271, 1.0, 0.0
    %v273 = vadd.f32 %v272, 0.0
    %v274 = vsel %vm271, 0.0, %v270
    %v275 = vsub.f32 %v168, %v192
    %v276 = vmul.f32 %v275, 0.5
    %v277 = vadd.f32 %v192, %v276
    %vm278 = vcmp.ge.f32.partialorder %v277, 1.0
    %v279 = vsel %vm278, 1.0, 0.0
    %v280 = vsel %vm278, 0.0, %v277
    %281 = vmatprep.subr.mxu0 0.0
    %282 = vmatpush1.msra.mxu0 %v171
    %283 = vmatprep.subr.mxu0 0.0
    %284 = vmatpush1.msra.mxu0 %v172
    %285 = vmatprep.subr.mxu0 0.0
    %286 = vmatpush1.msra.mxu0 %v173
    %287 = vmatprep.subr.mxu0 0.0
    %288 = vmatpush1.msra.mxu0 %v174
    %289 = vmatprep.subr.mxu0 0.0
    %290 = vmatpush1.msra.mxu0 %v175
    %291 = vmatprep.subr.mxu0 0.0
    %292 = vmatpush1.msra.mxu0 %v176
    %293 = vmatprep.subr.mxu0 0.0
    %294 = vmatpush1.msra.mxu0 %v177
    %295 = vmatprep.subr.mxu0 0.0
    %296 = vmatpush1.msra.mxu0 %v178
    %297 = vmatprep.subr.mxu0 0.0
    %298 = vmatpush1.msra.mxu0 %v179
    %299 = vmatprep.subr.mxu0 0.0
    %300 = vmatpush1.msra.mxu0 %v180
    %301 = vmatprep.subr.mxu0 0.0
    %302 = vmatpush1.msra.mxu0 %v181
    %303 = vmatprep.subr.mxu0 0.0
    %304 = vmatpush1.msra.mxu0 %v182
    %305 = vmatprep.subr.mxu0 0.0
    %306 = vmatpush1.msra.mxu0 %v183
    %307 = vmatprep.subr.mxu0 0.0
    %308 = vmatpush1.msra.mxu0 %v184
    %309 = vmatprep.subr.mxu0 0.0
    %310 = vmatpush1.msra.mxu0 %v185
    %311 = vmatprep.subr.mxu0 0.0
    %312 = vmatpush1.msra.mxu0 %v186
    %313 = vmatprep.subr.mxu0 0.0
    %314 = vmatpush1.msra.mxu0 0.0
    %315 = vmatprep.subr.mxu0 0.0
    %316 = vmatpush1.msra.mxu0 0.0
    %317 = vmatprep.subr.mxu0 0.0
    %318 = vmatpush1.msra.mxu0 0.0
    %319 = vmatprep.subr.mxu0 0.0
    %320 = vmatpush1.msra.mxu0 0.0
    %321 = vmatprep.subr.mxu0 0.0
    %322 = vmatpush1.msra.mxu0 0.0
    %323 = vmatprep.subr.mxu0 0.0
    %324 = vmatpush1.msra.mxu0 0.0
    %325 = vmatprep.subr.mxu0 0.0
    %326 = vmatpush1.msra.mxu0 0.0
    %327 = vmatprep.subr.mxu0 0.0
    %328 = vmatpush1.msra.mxu0 0.0
    %329 = vmatprep.subr.mxu0 0.0
    %330 = vmatpush1.msra.mxu0 0.0
    %331 = vmatprep.subr.mxu0 0.0
    %332 = vmatpush1.msra.mxu0 0.0
    %333 = vmatprep.subr.mxu0 0.0
    %334 = vmatpush1.msra.mxu0 0.0
    %335 = vmatprep.subr.mxu0 0.0
    %336 = vmatpush1.msra.mxu0 0.0
    %337 = vmatprep.subr.mxu0 0.0
    %338 = vmatpush1.msra.mxu0 0.0
    %339 = vmatprep.subr.mxu0 0.0
    %340 = vmatpush1.msra.mxu0 0.0
    %341 = vmatprep.subr.mxu0 0.0
    %342 = vmatpush1.msra.mxu0 0.0
    %343 = vmatprep.subr.mxu0 0.0
    %344 = vmatpush1.msra.mxu0 0.0
    %345 = vmatprep.mubr.f32.mxu0 0.0
    %346 = vmatmul.mubr.f32.gmra.mrb[0].mxu0 %v279
    %v347 = vpop.f32.mrb[0].mxu0
    %v348 = vadd.f32 %v197, %v347
    %v349 = vpop.f32.mrb[0].mxu0
    %350 = vdwg.mxu0
    %v351 = vsub.f32 %v348, %v274
    %v352 = vmul.f32 %v351, 0.5
    %v353 = vadd.f32 %v274, %v352
    %vm354 = vcmp.ge.f32.partialorder %v353, 1.0
    %v355 = vsel %vm354, 1.0, 0.0
    %v356 = vadd.f32 %v273, %v355
    %v357 = vsel %vm354, 0.0, %v353
    %v358 = vsub.f32 %v168, %v280
    %v359 = vmul.f32 %v358, 0.5
    %v360 = vadd.f32 %v280, %v359
    %vm361 = vcmp.ge.f32.partialorder %v360, 1.0
    %v362 = vsel %vm361, 1.0, 0.0
    %v363 = vsel %vm361, 0.0, %v360
    %364 = vmatprep.subr.mxu0 0.0
    %365 = vmatpush1.msra.mxu0 %v171
    %366 = vmatprep.subr.mxu0 0.0
    %367 = vmatpush1.msra.mxu0 %v172
    %368 = vmatprep.subr.mxu0 0.0
    %369 = vmatpush1.msra.mxu0 %v173
    %370 = vmatprep.subr.mxu0 0.0
    %371 = vmatpush1.msra.mxu0 %v174
    %372 = vmatprep.subr.mxu0 0.0
    %373 = vmatpush1.msra.mxu0 %v175
    %374 = vmatprep.subr.mxu0 0.0
    %375 = vmatpush1.msra.mxu0 %v176
    %376 = vmatprep.subr.mxu0 0.0
    %377 = vmatpush1.msra.mxu0 %v177
    %378 = vmatprep.subr.mxu0 0.0
    %379 = vmatpush1.msra.mxu0 %v178
    %380 = vmatprep.subr.mxu0 0.0
    %381 = vmatpush1.msra.mxu0 %v179
    %382 = vmatprep.subr.mxu0 0.0
    %383 = vmatpush1.msra.mxu0 %v180
    %384 = vmatprep.subr.mxu0 0.0
    %385 = vmatpush1.msra.mxu0 %v181
    %386 = vmatprep.subr.mxu0 0.0
    %387 = vmatpush1.msra.mxu0 %v182
    %388 = vmatprep.subr.mxu0 0.0
    %389 = vmatpush1.msra.mxu0 %v183
    %390 = vmatprep.subr.mxu0 0.0
    %391 = vmatpush1.msra.mxu0 %v184
    %392 = vmatprep.subr.mxu0 0.0
    %393 = vmatpush1.msra.mxu0 %v185
    %394 = vmatprep.subr.mxu0 0.0
    %395 = vmatpush1.msra.mxu0 %v186
    %396 = vmatprep.subr.mxu0 0.0
    %397 = vmatpush1.msra.mxu0 0.0
    %398 = vmatprep.subr.mxu0 0.0
    %399 = vmatpush1.msra.mxu0 0.0
    %400 = vmatprep.subr.mxu0 0.0
    %401 = vmatpush1.msra.mxu0 0.0
    %402 = vmatprep.subr.mxu0 0.0
    %403 = vmatpush1.msra.mxu0 0.0
    %404 = vmatprep.subr.mxu0 0.0
    %405 = vmatpush1.msra.mxu0 0.0
    %406 = vmatprep.subr.mxu0 0.0
    %407 = vmatpush1.msra.mxu0 0.0
    %408 = vmatprep.subr.mxu0 0.0
    %409 = vmatpush1.msra.mxu0 0.0
    %410 = vmatprep.subr.mxu0 0.0
    %411 = vmatpush1.msra.mxu0 0.0
    %412 = vmatprep.subr.mxu0 0.0
    %413 = vmatpush1.msra.mxu0 0.0
    %414 = vmatprep.subr.mxu0 0.0
    %415 = vmatpush1.msra.mxu0 0.0
    %416 = vmatprep.subr.mxu0 0.0
    %417 = vmatpush1.msra.mxu0 0.0
    %418 = vmatprep.subr.mxu0 0.0
    %419 = vmatpush1.msra.mxu0 0.0
    %420 = vmatprep.subr.mxu0 0.0
    %421 = vmatpush1.msra.mxu0 0.0
    %422 = vmatprep.subr.mxu0 0.0
    %423 = vmatpush1.msra.mxu0 0.0
    %424 = vmatprep.subr.mxu0 0.0
    %425 = vmatpush1.msra.mxu0 0.0
    %426 = vmatprep.subr.mxu0 0.0
    %427 = vmatpush1.msra.mxu0 0.0
    %428 = vmatprep.mubr.f32.mxu0 0.0
    %429 = vmatmul.mubr.f32.gmra.mrb[0].mxu0 %v362
    %v430 = vpop.f32.mrb[0].mxu0
    %v431 = vadd.f32 %v197, %v430
    %v432 = vpop.f32.mrb[0].mxu0
    %433 = vdwg.mxu0
    %v434 = vsub.f32 %v431, %v357
    %v435 = vmul.f32 %v434, 0.5
    %v436 = vadd.f32 %v357, %v435
    %vm437 = vcmp.ge.f32.partialorder %v436, 1.0
    %v438 = vsel %vm437, 1.0, 0.0
    %v439 = vadd.f32 %v356, %v438
    %v440 = vsel %vm437, 0.0, %v436
    %v441 = vsub.f32 %v168, %v363
    %v442 = vmul.f32 %v441, 0.5
    %v443 = vadd.f32 %v363, %v442
    %vm444 = vcmp.ge.f32.partialorder %v443, 1.0
    %v445 = vsel %vm444, 1.0, 0.0
    %446 = vmatprep.subr.mxu0 0.0
    %447 = vmatpush1.msra.mxu0 %v171
    %448 = vmatprep.subr.mxu0 0.0
    %449 = vmatpush1.msra.mxu0 %v172
    %450 = vmatprep.subr.mxu0 0.0
    %451 = vmatpush1.msra.mxu0 %v173
    %452 = vmatprep.subr.mxu0 0.0
    %453 = vmatpush1.msra.mxu0 %v174
    %454 = vmatprep.subr.mxu0 0.0
    %455 = vmatpush1.msra.mxu0 %v175
    %456 = vmatprep.subr.mxu0 0.0
    %457 = vmatpush1.msra.mxu0 %v176
    %458 = vmatprep.subr.mxu0 0.0
    %459 = vmatpush1.msra.mxu0 %v177
    %460 = vmatprep.subr.mxu0 0.0
    %461 = vmatpush1.msra.mxu0 %v178
    %462 = vmatprep.subr.mxu0 0.0
    %463 = vmatpush1.msra.mxu0 %v179
    %464 = vmatprep.subr.mxu0 0.0
    %465 = vmatpush1.msra.mxu0 %v180
    %466 = vmatprep.subr.mxu0 0.0
    %467 = vmatpush1.msra.mxu0 %v181
    %468 = vmatprep.subr.mxu0 0.0
    %469 = vmatpush1.msra.mxu0 %v182
    %470 = vmatprep.subr.mxu0 0.0
    %471 = vmatpush1.msra.mxu0 %v183
    %472 = vmatprep.subr.mxu0 0.0
    %473 = vmatpush1.msra.mxu0 %v184
    %474 = vmatprep.subr.mxu0 0.0
    %475 = vmatpush1.msra.mxu0 %v185
    %476 = vmatprep.subr.mxu0 0.0
    %477 = vmatpush1.msra.mxu0 %v186
    %478 = vmatprep.subr.mxu0 0.0
    %479 = vmatpush1.msra.mxu0 0.0
    %480 = vmatprep.subr.mxu0 0.0
    %481 = vmatpush1.msra.mxu0 0.0
    %482 = vmatprep.subr.mxu0 0.0
    %483 = vmatpush1.msra.mxu0 0.0
    %484 = vmatprep.subr.mxu0 0.0
    %485 = vmatpush1.msra.mxu0 0.0
    %486 = vmatprep.subr.mxu0 0.0
    %487 = vmatpush1.msra.mxu0 0.0
    %488 = vmatprep.subr.mxu0 0.0
    %489 = vmatpush1.msra.mxu0 0.0
    %490 = vmatprep.subr.mxu0 0.0
    %491 = vmatpush1.msra.mxu0 0.0
    %492 = vmatprep.subr.mxu0 0.0
    %493 = vmatpush1.msra.mxu0 0.0
    %494 = vmatprep.subr.mxu0 0.0
    %495 = vmatpush1.msra.mxu0 0.0
    %496 = vmatprep.subr.mxu0 0.0
    %497 = vmatpush1.msra.mxu0 0.0
    %498 = vmatprep.subr.mxu0 0.0
    %499 = vmatpush1.msra.mxu0 0.0
    %500 = vmatprep.subr.mxu0 0.0
    %501 = vmatpush1.msra.mxu0 0.0
    %502 = vmatprep.subr.mxu0 0.0
    %503 = vmatpush1.msra.mxu0 0.0
    %504 = vmatprep.subr.mxu0 0.0
    %505 = vmatpush1.msra.mxu0 0.0
    %506 = vmatprep.subr.mxu0 0.0
    %507 = vmatpush1.msra.mxu0 0.0
    %508 = vmatprep.subr.mxu0 0.0
    %509 = vmatpush1.msra.mxu0 0.0
    %510 = vmatprep.mubr.f32.mxu0 0.0
    %511 = vmatmul.mubr.f32.gmra.mrb[0].mxu0 %v445
    %v512 = vpop.f32.mrb[0].mxu0
    %v513 = vadd.f32 %v197, %v512
    %v514 = vpop.f32.mrb[0].mxu0
    %515 = vdwg.mxu0
    %v516 = vsub.f32 %v513, %v440
    %v517 = vmul.f32 %v516, 0.5
    %v518 = vadd.f32 %v440, %v517
    %vm519 = vcmp.ge.f32.partialorder %v518, 1.0
    %v520 = vsel %vm519, 1.0, 0.0
    %v521 = vadd.f32 %v439, %v520
    %v522 = vmul.f32 %v521, 0.25
    %523 = vst [vmem:[#allocation8] sm:$0xff] %v522
    // Predicated region
    $region34: #{tpu_custom_call.1} parent=1 // pred_check
      _
    $region35: #{tpu_custom_call.1} parent=1 // pred_check_branch
      %525 = sbr.rel (0) target = $region37
    $region36: #{tpu_custom_call.1} parent=1 // pred_region
      %s527 = ssub.s32 128, 128
      %528 = vsyncadd [#allocation4], %s527
      %s530 = sshll.u32 [#allocation8], 4
      %s531 = int_to_ptr.vmem [resolvable:$true] %s530
      %533 = dma.vmem_to_hbm [thread:$0]  %s531, 128, %s5, [#allocation4]
    $region37: #{tpu_custom_call.1} parent=1 // pred_fallthru
      _
    // Predicated region
    $region38: #{tpu_custom_call.1} parent=1 // pred_check
      _
    $region39: #{tpu_custom_call.1} parent=1 // pred_check_branch
      %535 = sbr.rel (0) target = $region41
    $region40: #{tpu_custom_call.1} parent=1 // pred_region
      %536 = dma.done [#allocation4], 128
    $region41: #{tpu_custom_call.1} parent=1 // pred_fallthru
      _
    %537 = vsyncpa [#allocation3], 1
    %538 = vsyncpa [#allocation6], 1
    %539 = vsyncpa [#allocation4], 1

</llo_original>
